<compile_context>
chip_gen: v6e
topology: v6e:2x2x1
jax: 0.10.0
libtpu: 0.0.40
codegen_flags: <defaults>
</compile_context>

<pallas_src>
import jax
import jax.numpy as jnp
from jax.experimental import pallas as pl
from jax.experimental.pallas import tpu as pltpu


def _round_up(x, m):
    return ((x + m - 1) // m) * m


def _pad_last(x, target):
    if x.shape[-1] == target:
        return x
    return jnp.pad(x, ((0, 0), (0, target - x.shape[-1])))


# ----------------------------------------------------------------------------
# Pallas kernel: fused (implicit) concat + Linear
#   out = tab @ W_tab + txt @ W_txt + b        (== cat(tab, txt) @ W_stacked + b)
# Two MXU dots into one f32 accumulator; bf16 cast of activations in-kernel.
# ----------------------------------------------------------------------------
def _fusion_kernel(tab_ref, txt_ref, w_tab_ref, w_txt_ref, b_ref, o_ref):
    tab = tab_ref[...].astype(jnp.bfloat16)            # (tm, H_pad)
    txt = txt_ref[...].astype(jnp.bfloat16)            # (tm, D_pad)
    acc = jnp.dot(tab, w_tab_ref[...], preferred_element_type=jnp.float32)
    acc = acc + jnp.dot(txt, w_txt_ref[...], preferred_element_type=jnp.float32)
    o_ref[...] = (acc + b_ref[...]).astype(o_ref.dtype)


def _pick_batch_tiling(B, max_batch_tile):
    """Pad B to a multiple of 256 and pick tm dividing the padded batch."""
    b_pad = _round_up(B, 256)
    tm = 256
    for t in range(min(max_batch_tile, b_pad), 255, -256):
        if b_pad % t == 0:
            tm = t
            break
    # Guarantee >= 2 grid steps when possible so the "parallel" batch axis can
    # shard across v7x's two TensorCores (no effect on single-TC v5e/v6e).
    if b_pad // tm == 1 and b_pad >= 512:
        tm = b_pad // 2            # b_pad is a multiple of 256 -> tm mult of 128
    return b_pad, tm


def fusion_layer_pallas(tab, txt, w_tab, w_txt, bias_row, *, max_batch_tile=1024):
    """tab: (B, H_pad) f32, txt: (B, D_pad) f32 (feature dims multiples of 128)
       w_tab: (H_pad, D_pad) bf16, w_txt: (D_pad, D_pad) bf16 (pre-transposed,
       zero-padded), bias_row: (1, D_pad) f32.  Returns (B, D_pad) f32."""
    B, h_pad = tab.shape
    _, d_pad = txt.shape
    assert w_tab.shape == (h_pad, d_pad) and w_txt.shape == (d_pad, d_pad)

    b_pad, tm = _pick_batch_tiling(B, max_batch_tile)
    if b_pad != B:
        tab = jnp.pad(tab, ((0, b_pad - B), (0, 0)))
        txt = jnp.pad(txt, ((0, b_pad - B), (0, 0)))

    out = pl.pallas_call(
        _fusion_kernel,
        out_shape=jax.ShapeDtypeStruct((b_pad, d_pad), jnp.float32),
        grid=(b_pad // tm,),
        in_specs=[
            pl.BlockSpec((tm, h_pad), lambda i: (i, 0)),      # table tile (f32)
            pl.BlockSpec((tm, d_pad), lambda i: (i, 0)),      # text tile  (f32)
            pl.BlockSpec((h_pad, d_pad), lambda i: (0, 0)),   # resident W_tab
            pl.BlockSpec((d_pad, d_pad), lambda i: (0, 0)),   # resident W_txt
            pl.BlockSpec((1, d_pad), lambda i: (0, 0)),       # resident bias
        ],
        out_specs=pl.BlockSpec((tm, d_pad), lambda i: (i, 0)),
        compiler_params=pltpu.CompilerParams(
            dimension_semantics=("parallel",)),
    )(tab, txt, w_tab, w_txt, bias_row)
    return out if b_pad == B else out[:B]


# ----------------------------------------------------------------------------
# Module-level wrapper mirroring PretrainedMultimodalEncoder.forward
# ----------------------------------------------------------------------------
class PretrainedMultimodalEncoderPallas:
    # Realistic backbone dims: table-transformer hidden=256, MiniLM dim=384.
    def __init__(self, hidden_size=256, text_dim=384, key=None,
                 min_pallas_batch=256):
        if key is None:
            key = jax.random.PRNGKey(0)
        k_w, k_b = jax.random.split(key)
        fan_in = hidden_size + text_dim
        bound = float(1.0 / jnp.sqrt(fan_in))

        self.hidden_size = hidden_size
        self.text_dim = text_dim
        # Below this batch, a fused XLA concat+dot beats pallas_call dispatch.
        self.min_pallas_batch = min_pallas_batch

        # PyTorch-layout parameters (reference / source of truth).
        self.fusion_weight = jax.random.uniform(
            k_w, (text_dim, fan_in), jnp.float32, -bound, bound)
        self.fusion_bias = jax.random.uniform(
            k_b, (text_dim,), jnp.float32, -bound, bound)

        # ---- Pre-compute Pallas-side parameters ONCE (no per-call glue) ----
        self.h_pad = _round_up(hidden_size, 128)
        self.d_pad = _round_up(text_dim, 128)
        w_t = self.fusion_weight.T                       # (fan_in, text_dim)
        w_tab = jnp.zeros((self.h_pad, self.d_pad), jnp.float32)
        w_tab = w_tab.at[:hidden_size, :text_dim].set(w_t[:hidden_size])
        w_txt = jnp.zeros((self.d_pad, self.d_pad), jnp.float32)
        w_txt = w_txt.at[:text_dim, :text_dim].set(w_t[hidden_size:])
        self.w_tab_bf16 = w_tab.astype(jnp.bfloat16)
        self.w_txt_bf16 = w_txt.astype(jnp.bfloat16)
        self.bias_row = (jnp.zeros((1, self.d_pad), jnp.float32)
                         .at[0, :text_dim].set(self.fusion_bias))

    def forward(self, table_embeddings=None, text_embeddings=None):
        """table_embeddings: (B, hidden_size) or None
           text_embeddings : (B, text_dim)    or None
        Single modality -> passthrough; both -> concat + fusion Linear."""
        embeddings = [e for e in (table_embeddings, text_embeddings)
                      if e is not None]
        if len(embeddings) <= 1:
            return embeddings[0]

        B = table_embeddings.shape[0]
        if B < self.min_pallas_batch:
            # Small problem: pallas_call fixed overhead + padding would
            # dominate; a plain XLA concat+dot is equal or faster.
            combined = jnp.concatenate(
                [table_embeddings, text_embeddings], axis=1)
            return combined @ self.fusion_weight.T + self.fusion_bias

        # Feature-dim padding only (no-op for the default 256/384 dims); the
        # bf16 cast happens inside the kernel, not here.
        tab = _pad_last(table_embeddings.astype(jnp.float32), self.h_pad)
        txt = _pad_last(text_embeddings.astype(jnp.float32), self.d_pad)
        out = fusion_layer_pallas(tab, txt, self.w_tab_bf16, self.w_txt_bf16,
                                  self.bias_row)
        if self.d_pad != self.text_dim:
            out = out[:, :self.text_dim]
        return out

    def get_embedding_dimension(self):
        return self.text_dim


# ----------------------------------------------------------------------------
# Reference (plain JAX) for correctness check
# ----------------------------------------------------------------------------
def _reference_forward(tab, txt, w, b):
    combined = jnp.concatenate([tab, txt], axis=1)
    return combined @ w.T + b


def _bf16_round(x):
    return x.astype(jnp.bfloat16).astype(jnp.float32)


if __name__ == "__main__":
    root = jax.random.PRNGKey(0)
    k_mod, k_tab, k_txt, k_mod2, k_tab2, k_txt2 = jax.random.split(root, 6)

    # ---------------- Test 1: Pallas path, aligned dims, 2-step grid --------
    B = 512
    HIDDEN = 256   # table-transformer hidden_size
    TEXT_D = 384   # MiniLM sentence-embedding dimension
    enc = PretrainedMultimodalEncoderPallas(HIDDEN, TEXT_D, key=k_mod)

    # Synthetic outputs of the (untranslatable) pretrained encoders.
    table_emb = jax.random.normal(k_tab, (B, HIDDEN), jnp.float32)
    text_emb = jax.random.normal(k_txt, (B, TEXT_D), jnp.float32)

    fused = enc.forward(table_embeddings=table_emb, text_embeddings=text_emb)
    fused = jax.block_until_ready(fused)
    assert fused.shape == (B, TEXT_D)

    # bf16-consistent reference (same rounding of operands, f32 accumulate).
    ref_bf16 = _reference_forward(
        _bf16_round(table_emb), _bf16_round(text_emb),
        _bf16_round(enc.fusion_weight), enc.fusion_bias)
    assert jnp.allclose(fused, ref_bf16, atol=2e-3, rtol=2e-3)

    # Loose sanity check against the full-f32 reference.
    ref_f32 = _reference_forward(table_emb, text_emb,
                                 enc.fusion_weight, enc.fusion_bias)
    assert jnp.allclose(fused, ref_f32, atol=5e-2, rtol=5e-2)

    # ---------------- Test 2: non-128-aligned dims + ragged batch -----------
    B2, HID2, TXT2 = 300, 250, 300       # exercises feature + batch padding
    enc2 = PretrainedMultimodalEncoderPallas(HID2, TXT2, key=k_mod2,
                                             min_pallas_batch=8)
    tab2 = jax.random.normal(k_tab2, (B2, HID2), jnp.float32)
    txt2 = jax.random.normal(k_txt2, (B2, TXT2), jnp.float32)
    fused2 = jax.block_until_ready(
        enc2.forward(table_embeddings=tab2, text_embeddings=txt2))
    assert fused2.shape == (B2, TXT2)
    ref2 = _reference_forward(_bf16_round(tab2), _bf16_round(txt2),
                              _bf16_round(enc2.fusion_weight), enc2.fusion_bias)
    assert jnp.allclose(fused2, ref2, atol=2e-3, rtol=2e-3)

    # ---------------- Test 3: tiny-batch fallback path (plain XLA dot) ------
    small_fused = jax.block_until_ready(
        enc.forward(table_embeddings=table_emb[:4],
                    text_embeddings=text_emb[:4]))
    assert jnp.allclose(small_fused, ref_f32[:4], atol=1e-5, rtol=1e-5)

    # ---------------- Test 4: single-modality passthrough -------------------
    single = jax.block_until_ready(enc.forward(text_embeddings=text_emb))
    assert jnp.array_equal(single, text_emb)

    print("KERNEL_OK")
</pallas_src>

<mosaic_0001>
module attributes {stable_mosaic.version = 11 : i64} {
  func.func @_fusion_kernel(%arg0: i32, %arg1: memref<256x256xf32, #tpu.memory_space<vmem>>, %arg2: memref<256x384xf32, #tpu.memory_space<vmem>>, %arg3: memref<256x384xbf16, #tpu.memory_space<vmem>>, %arg4: memref<384x384xbf16, #tpu.memory_space<vmem>>, %arg5: memref<1x384xf32, #tpu.memory_space<vmem>>, %arg6: memref<256x384xf32, #tpu.memory_space<vmem>>) attributes {dimension_semantics = [#tpu.dimension_semantics<parallel>], iteration_bounds = array<i64: 2>, scalar_prefetch = 0 : i64, scratch_operands = 0 : i64, tpu.core_type = #tpu.core_type<tc>, window_params = [{transform_indices = @transform_0, window_bounds = array<i64: 256, 256>}, {transform_indices = @transform_1, window_bounds = array<i64: 256, 384>}, {pipeline_mode = #tpu.pipeline_mode<synchronous>, transform_indices = @transform_2, window_bounds = array<i64: 256, 384>}, {pipeline_mode = #tpu.pipeline_mode<synchronous>, transform_indices = @transform_3, window_bounds = array<i64: 384, 384>}, {pipeline_mode = #tpu.pipeline_mode<synchronous>, transform_indices = @transform_4, window_bounds = array<i64: 1, 384>}, {transform_indices = @transform_5, window_bounds = array<i64: 256, 384>}]} {
    %c0 = arith.constant 0 : index
    %c0_0 = arith.constant 0 : index
    %0 = vector.load %arg1[%c0, %c0_0] : memref<256x256xf32, #tpu.memory_space<vmem>>, vector<256x256xf32>
    %1 = arith.truncf %0 : vector<256x256xf32> to vector<256x256xbf16>
    %c0_1 = arith.constant 0 : index
    %c0_2 = arith.constant 0 : index
    %2 = vector.load %arg2[%c0_1, %c0_2] : memref<256x384xf32, #tpu.memory_space<vmem>>, vector<256x384xf32>
    %3 = arith.truncf %2 : vector<256x384xf32> to vector<256x384xbf16>
    %c0_3 = arith.constant 0 : index
    %c0_4 = arith.constant 0 : index
    %4 = vector.load %arg3[%c0_3, %c0_4] : memref<256x384xbf16, #tpu.memory_space<vmem>>, vector<256x384xbf16>
    %cst = arith.constant dense<0.000000e+00> : vector<256x384xf32>
    %5 = tpu.matmul %1, %4, %cst {dimension_numbers = #tpu.dot_dimension_numbers<[1], [0], [0], [1], [0, 0, 1, 1], [], []>} : vector<256x256xbf16>, vector<256x384xbf16>, vector<256x384xf32> -> vector<256x384xf32>
    %c0_5 = arith.constant 0 : index
    %c0_6 = arith.constant 0 : index
    %6 = vector.load %arg4[%c0_5, %c0_6] : memref<384x384xbf16, #tpu.memory_space<vmem>>, vector<384x384xbf16>
    %cst_7 = arith.constant dense<0.000000e+00> : vector<256x384xf32>
    %7 = tpu.matmul %3, %6, %cst_7 {dimension_numbers = #tpu.dot_dimension_numbers<[1], [0], [0], [1], [0, 0, 1, 1], [], []>} : vector<256x384xbf16>, vector<384x384xbf16>, vector<256x384xf32> -> vector<256x384xf32>
    %8 = arith.addf %5, %7 : vector<256x384xf32>
    %c0_8 = arith.constant 0 : index
    %c0_9 = arith.constant 0 : index
    %9 = vector.load %arg5[%c0_8, %c0_9] : memref<1x384xf32, #tpu.memory_space<vmem>>, vector<1x384xf32>
    %10 = vector.broadcast %9 : vector<1x384xf32> to vector<256x384xf32>
    %11 = arith.addf %8, %10 : vector<256x384xf32>
    %c0_10 = arith.constant 0 : index
    %c0_11 = arith.constant 0 : index
    %12 = vector.load %arg6[%c0_10, %c0_11] : memref<256x384xf32, #tpu.memory_space<vmem>>, vector<256x384xf32>
    tpu.vector_store %arg6[%c0_10, %c0_11], %11 {strides = array<i32>} : memref<256x384xf32, #tpu.memory_space<vmem>>, vector<256x384xf32>,
    return
  }
  func.func @transform_0(%arg0: i32) -> (i32, i32) {
    %c0_i32 = arith.constant 0 : i32
    %c0_i32_0 = arith.constant 0 : i32
    return %arg0, %c0_i32 : i32, i32
  }
  func.func @transform_1(%arg0: i32) -> (i32, i32) {
    %c0_i32 = arith.constant 0 : i32
    %c0_i32_0 = arith.constant 0 : i32
    return %arg0, %c0_i32 : i32, i32
  }
  func.func @transform_2(%arg0: i32) -> (i32, i32) {
    %c0_i32 = arith.constant 0 : i32
    %c0_i32_0 = arith.constant 0 : i32
    %c0_i32_1 = arith.constant 0 : i32
    return %c0_i32, %c0_i32_0 : i32, i32
  }
  func.func @transform_3(%arg0: i32) -> (i32, i32) {
    %c0_i32 = arith.constant 0 : i32
    %c0_i32_0 = arith.constant 0 : i32
    %c0_i32_1 = arith.constant 0 : i32
    return %c0_i32, %c0_i32_0 : i32, i32
  }
  func.func @transform_4(%arg0: i32) -> (i32, i32) {
    %c0_i32 = arith.constant 0 : i32
    %c0_i32_0 = arith.constant 0 : i32
    %c0_i32_1 = arith.constant 0 : i32
    return %c0_i32, %c0_i32_0 : i32, i32
  }
  func.func @transform_5(%arg0: i32) -> (i32, i32) {
    %c0_i32 = arith.constant 0 : i32
    %c0_i32_0 = arith.constant 0 : i32
    return %arg0, %c0_i32 : i32, i32
  }
}

</mosaic_0001>

<llo_original>
// kernel: tpu_custom_call.1
$region0: #{tpu_custom_call.1}
  #allocation0 [shape = 'u32[]', space=smem, size = 0x4, offset = 0x4, fixed_abs, tag = 'smem constant byte address 0x4 - core index']
  #allocation1 [shape = 'u32[144,128]{1,0:T(1,128)}', space=vmem, size = 0x12000, scoped, tag = 'internal scratch']
  %s0 = inlined_call_operand.hbm [shape: f32[512,256], index: 0, kind: input, shape index: {}]
  %s1 = inlined_call_operand.hbm [shape: f32[512,384], index: 1, kind: input, shape index: {}]
  %s2 = inlined_call_operand.hbm [shape: bf16[256,384], index: 2, kind: input, shape index: {}]
  %s3 = inlined_call_operand.hbm [shape: bf16[384,384], index: 3, kind: input, shape index: {}]
  %s4 = inlined_call_operand.vmem [shape: f32[1,384], index: 4, kind: input, shape index: {}]
  %s5 = inlined_call_operand.hbm [shape: f32[512,384], index: 5, kind: output, shape index: {}]
  %s6 = sld [smem:[#allocation0]]
  $region69: #{tpu_custom_call.1} parent=0
    _
  %s8 = ssub.s32 1, %s6
  %s9 = scalar_select 0, %s8, %s6
  $region1: #{tpu_custom_call.1} parent=0
    #allocation2 [shape = 'u8[524288]{0}', space=vmem, size = 0x80000, scoped, tag = 'input window, operand 0']
    #allocation3 [shape = 's32[2]{0}', space=sflag, size = 0x8, scoped, tag = 'scoped memory for tpu_custom_call.1']
    #allocation4 [shape = 's32[2]{0}', space=sflag, size = 0x8, scoped, tag = 'scoped memory for tpu_custom_call.1']
    #allocation5 [shape = 'u8[786432]{0}', space=vmem, size = 0xc0000, scoped, tag = 'input window, operand 1']
    #allocation6 [shape = 's32[2]{0}', space=sflag, size = 0x8, scoped, tag = 'scoped memory for tpu_custom_call.1']
    #allocation7 [shape = 'u8[196608]{0}', space=vmem, size = 0x30000, scoped, tag = 'input window, operand 2, single buffered']
    #allocation8 [shape = 'u8[294912]{0}', space=vmem, size = 0x48000, scoped, tag = 'input window, operand 3, single buffered']
    #allocation9 [shape = 's32[1]{0}', space=sflag, size = 0x4, scoped, tag = 'scoped memory for tpu_custom_call.1']
    #allocation10 [shape = 'u8[786432]{0}', space=vmem, size = 0xc0000, scoped, tag = 'output window, operand 0']
    %10 = vsyncpa [#allocation3], 0
    %s11 = scalar_lea.sflag [#allocation3], 1
    %12 = vsyncpa %s11, 0
    %13 = vsyncpa [#allocation6], 0
    %s14 = scalar_lea.sflag [#allocation6], 1
    %15 = vsyncpa %s14, 0
    %16 = vsyncpa [#allocation9], 0
    %17 = vsyncpa [#allocation4], 0
    %s18 = scalar_lea.sflag [#allocation4], 1
    %19 = vsyncpa %s18, 0
    loop: start=0, step=1, limit=4
    $region2: #{tpu_custom_call.1} parent=1 // loop_pre_header
      _
    $region3: #{tpu_custom_call.1} parent=1 // loop_header
      %s21 = sphi 0, %s25
      %p22 = scmp.ge.s32.totalorder %s21, 4
      %s31 = sphi 0, %s33
      %s34 = sphi 0, %s31
      %s35 = sphi 0, %s34
      %s51 = sphi 0, %s35
      %s57 = sphi 0, %s59
      %s60 = sphi 0, %s57
      %s61 = sphi 0, %s60
      %s77 = sphi 0, %s61
      %s81 = sphi 0, %s81
      %s83 = sphi 0, %s81
      %s84 = sphi 0, %s83
      %s98 = sphi 0, %s84
      %s102 = sphi 0, %s102
      %s104 = sphi 0, %s102
      %s105 = sphi 0, %s104
      %s119 = sphi 0, %s105
      %s123 = sphi 0, %s123
      %s125 = sphi 0, %s123
      %s126 = sphi 0, %s125
      %s140 = sphi 0, %s126
      %s146 = sphi 0, %s148
      %s149 = sphi 0, %s146
      %s150 = sphi 0, %s149
      %s166 = sphi 0, %s150
    $region4: #{tpu_custom_call.1} parent=1 // loop_header_branch
      %24 = sbr.rel (%p22) target = $region8
    $region5: #{tpu_custom_call.1} parent=1 // loop_body
      %s26 = ssub.s32 %s21, 1
      %s27 = ssub.s32 %s21, 2
      %s28 = sadd.s32 %s21, 1
      %s29 = ssub.s32 %s21, %s28
      %p30 = scmp.eq.s32.totalorder %s29, 0
      %s32 = sadd.s32 %s31, 1
      %s33 = scalar_select %p30, %s31, %s32
      %p36 = pneg %p30
      %p37 = scmp.eq.s32.totalorder %s21, 1
      %p38 = por %p36, %p37
      %p39 = scmp.ne.s32.totalorder %s31, %s34
      %p40 = scmp.eq.s32.totalorder %s21, 0
      %p41 = por %p39, %p40
      %p42 = scmp.ne.s32.totalorder %s31, %s34
      %p43 = scmp.eq.s32.totalorder %s26, 1
      %p44 = por %p42, %p43
      %p45 = scmp.ne.s32.totalorder %s34, %s35
      %p46 = scmp.eq.s32.totalorder %s26, 0
      %p47 = por %p45, %p46
      %p48 = scmp.ne.s32.totalorder %s34, %s35
      %p49 = scmp.eq.s32.totalorder %s27, 1
      %p50 = por %p48, %p49
      %p52 = scmp.ne.s32.totalorder %s35, %s51
      %p53 = scmp.eq.s32.totalorder %s27, 0
      %p54 = por %p52, %p53
      %s55 = ssub.s32 %s21, %s28
      %p56 = scmp.eq.s32.totalorder %s55, 0
      %s58 = sadd.s32 %s57, 1
      %s59 = scalar_select %p56, %s57, %s58
      %p62 = pneg %p56
      %p63 = scmp.eq.s32.totalorder %s21, 1
      %p64 = por %p62, %p63
      %p65 = scmp.ne.s32.totalorder %s57, %s60
      %p66 = scmp.eq.s32.totalorder %s21, 0
      %p67 = por %p65, %p66
      %p68 = scmp.ne.s32.totalorder %s57, %s60
      %p69 = scmp.eq.s32.totalorder %s26, 1
      %p70 = por %p68, %p69
      %p71 = scmp.ne.s32.totalorder %s60, %s61
      %p72 = scmp.eq.s32.totalorder %s26, 0
      %p73 = por %p71, %p72
      %p74 = scmp.ne.s32.totalorder %s60, %s61
      %p75 = scmp.eq.s32.totalorder %s27, 1
      %p76 = por %p74, %p75
      %p78 = scmp.ne.s32.totalorder %s61, %s77
      %p79 = scmp.eq.s32.totalorder %s27, 0
      %p80 = por %p78, %p79
      %s82 = sadd.s32 %s81, 1
      %p85 = scmp.eq.s32.totalorder %s21, 1
      %p86 = scmp.ne.s32.totalorder %s81, %s83
      %p87 = scmp.eq.s32.totalorder %s21, 0
      %p88 = por %p86, %p87
      %p89 = scmp.ne.s32.totalorder %s81, %s83
      %p90 = scmp.eq.s32.totalorder %s26, 1
      %p91 = por %p89, %p90
      %p92 = scmp.ne.s32.totalorder %s83, %s84
      %p93 = scmp.eq.s32.totalorder %s26, 0
      %p94 = por %p92, %p93
      %p95 = scmp.ne.s32.totalorder %s83, %s84
      %p96 = scmp.eq.s32.totalorder %s27, 1
      %p97 = por %p95, %p96
      %p99 = scmp.ne.s32.totalorder %s84, %s98
      %p100 = scmp.eq.s32.totalorder %s27, 0
      %p101 = por %p99, %p100
      %s103 = sadd.s32 %s102, 1
      %p106 = scmp.eq.s32.totalorder %s21, 1
      %p107 = scmp.ne.s32.totalorder %s102, %s104
      %p108 = scmp.eq.s32.totalorder %s21, 0
      %p109 = por %p107, %p108
      %p110 = scmp.ne.s32.totalorder %s102, %s104
      %p111 = scmp.eq.s32.totalorder %s26, 1
      %p112 = por %p110, %p111
      %p113 = scmp.ne.s32.totalorder %s104, %s105
      %p114 = scmp.eq.s32.totalorder %s26, 0
      %p115 = por %p113, %p114
      %p116 = scmp.ne.s32.totalorder %s104, %s105
      %p117 = scmp.eq.s32.totalorder %s27, 1
      %p118 = por %p116, %p117
      %p120 = scmp.ne.s32.totalorder %s105, %s119
      %p121 = scmp.eq.s32.totalorder %s27, 0
      %p122 = por %p120, %p121
      %s124 = sadd.s32 %s123, 1
      %p127 = scmp.eq.s32.totalorder %s21, 1
      %p128 = scmp.ne.s32.totalorder %s123, %s125
      %p129 = scmp.eq.s32.totalorder %s21, 0
      %p130 = por %p128, %p129
      %p131 = scmp.ne.s32.totalorder %s123, %s125
      %p132 = scmp.eq.s32.totalorder %s26, 1
      %p133 = por %p131, %p132
      %p134 = scmp.ne.s32.totalorder %s125, %s126
      %p135 = scmp.eq.s32.totalorder %s26, 0
      %p136 = por %p134, %p135
      %p137 = scmp.ne.s32.totalorder %s125, %s126
      %p138 = scmp.eq.s32.totalorder %s27, 1
      %p139 = por %p137, %p138
      %p141 = scmp.ne.s32.totalorder %s126, %s140
      %p142 = scmp.eq.s32.totalorder %s27, 0
      %p143 = por %p141, %p142
      %s144 = ssub.s32 %s21, %s28
      %p145 = scmp.eq.s32.totalorder %s144, 0
      %s147 = sadd.s32 %s146, 1
      %s148 = scalar_select %p145, %s146, %s147
      %p151 = pneg %p145
      %p152 = scmp.eq.s32.totalorder %s21, 1
      %p153 = por %p151, %p152
      %p154 = scmp.ne.s32.totalorder %s146, %s149
      %p155 = scmp.eq.s32.totalorder %s21, 0
      %p156 = por %p154, %p155
      %p157 = scmp.ne.s32.totalorder %s146, %s149
      %p158 = scmp.eq.s32.totalorder %s26, 1
      %p159 = por %p157, %p158
      %p160 = scmp.ne.s32.totalorder %s149, %s150
      %p161 = scmp.eq.s32.totalorder %s26, 0
      %p162 = por %p160, %p161
      %p163 = scmp.ne.s32.totalorder %s149, %s150
      %p164 = scmp.eq.s32.totalorder %s27, 1
      %p165 = por %p163, %p164
      %p167 = scmp.ne.s32.totalorder %s150, %s166
      %p168 = scmp.eq.s32.totalorder %s27, 0
      %p169 = por %p167, %p168
      %p170 = scmp.le.s32.totalorder 1, %s21
      %p171 = scmp.lt.s32.totalorder %s21, 3
      %p172 = pnand %p170, %p171
      %p173 = pneg %p172
      // Predicated region
      $region9: #{tpu_custom_call.1} parent=5 // pred_check
        _
      $region10: #{tpu_custom_call.1} parent=5 // pred_check_branch
        %175 = sbr.rel (%p172) target = $region12
      $region11: #{tpu_custom_call.1} parent=5 // pred_region
        %s176 = ssub.s32 %s21, 1
        // Predicated region
        $region13: #{tpu_custom_call.1} parent=11 // pred_check
          %p177 = pneg %p94
        $region14: #{tpu_custom_call.1} parent=11 // pred_check_branch
          %179 = sbr.rel (%p177) target = $region16
        $region15: #{tpu_custom_call.1} parent=11 // pred_region
          %s181 = ssub.s32 6144, 6144
          %182 = vsyncadd [#allocation6], %s181
          %s183 = sshll.u32 [#allocation7], 4
          %s184 = int_to_ptr.vmem [resolvable:$true] %s183
          %189 = dma.hbm_to_vmem [thread:$0]  %s2, 6144, %s184, [#allocation6], 192, 192, 12
        $region16: #{tpu_custom_call.1} parent=11 // pred_fallthru
          _
        // Predicated region
        $region17: #{tpu_custom_call.1} parent=11 // pred_check
          %p190 = pneg %p115
        $region18: #{tpu_custom_call.1} parent=11 // pred_check_branch
          %192 = sbr.rel (%p190) target = $region20
        $region19: #{tpu_custom_call.1} parent=11 // pred_region
          %s194 = ssub.s32 9216, 9216
          %195 = vsyncadd [#allocation9], %s194
          %s196 = sshll.u32 [#allocation8], 4
          %s197 = int_to_ptr.vmem [resolvable:$true] %s196
          %202 = dma.hbm_to_vmem [thread:$0]  %s3, 9216, %s197, [#allocation9], 192, 192, 12
        $region20: #{tpu_custom_call.1} parent=11 // pred_fallthru
          _
        // Predicated region
        $region21: #{tpu_custom_call.1} parent=11 // pred_check
          %p203 = pneg %p136
        $region22: #{tpu_custom_call.1} parent=11 // pred_check_branch
          %205 = sbr.rel (%p203) target = $region24
        $region23: #{tpu_custom_call.1} parent=11 // pred_region
          _
        $region24: #{tpu_custom_call.1} parent=11 // pred_fallthru
          _
      $region12: #{tpu_custom_call.1} parent=5 // pred_fallthru
        _
      %p206 = scmp.lt.s32.totalorder %s21, 2
      // Predicated region
      $region25: #{tpu_custom_call.1} parent=5 // pred_check
        %p207 = pneg %p206
      $region26: #{tpu_custom_call.1} parent=5 // pred_check_branch
        %209 = sbr.rel (%p207) target = $region28
      $region27: #{tpu_custom_call.1} parent=5 // pred_region
        // Predicated region
        $region29: #{tpu_custom_call.1} parent=27 // pred_check
          %p210 = pneg %p41
        $region30: #{tpu_custom_call.1} parent=27 // pred_check_branch
          %212 = sbr.rel (%p210) target = $region32
        $region31: #{tpu_custom_call.1} parent=27 // pred_region
          %s213 = sand.u32 %s31, 1
          %s214 = scalar_lea.sflag [#allocation3], %s213
          %s215 = sand.u32 %s31, 1
          %s216 = smul.addr %s215, 512
          %s217 = scalar_lea.vmem [#allocation2], %s216
          %s218 = smul.u32 32, %s21
          %s220 = ssub.s32 8192, 8192
          %221 = vsyncadd %s214, %s220
          %s222 = smul.addr %s218, 2
          %s223 = smul.addr %s222, 128
          %s224 = scalar_lea.hbm %s0, %s223
          %s225 = sshll.u32 %s217, 4
          %s226 = int_to_ptr.vmem [resolvable:$true] %s225
          %231 = dma.hbm_to_vmem [thread:$0]  %s224, 8192, %s226, %s214, 256, 256, 16
        $region32: #{tpu_custom_call.1} parent=27 // pred_fallthru
          _
        // Predicated region
        $region33: #{tpu_custom_call.1} parent=27 // pred_check
          %p232 = pneg %p67
        $region34: #{tpu_custom_call.1} parent=27 // pred_check_branch
          %234 = sbr.rel (%p232) target = $region36
        $region35: #{tpu_custom_call.1} parent=27 // pred_region
          %s235 = sand.u32 %s21, 1
          %s236 = scalar_lea.sflag [#allocation6], %s235
          %s237 = sand.u32 %s57, 1
          %s238 = smul.addr %s237, 768
          %s239 = scalar_lea.vmem [#allocation5], %s238
          %s240 = smul.u32 32, %s21
          %s242 = ssub.s32 12288, 12288
          %243 = vsyncadd %s236, %s242
          %s244 = smul.addr %s240, 3
          %s245 = smul.addr %s244, 128
          %s246 = scalar_lea.hbm %s1, %s245
          %s247 = sshll.u32 %s239, 4
          %s248 = int_to_ptr.vmem [resolvable:$true] %s247
          %253 = dma.hbm_to_vmem [thread:$0]  %s246, 12288, %s248, %s236, 384, 384, 24
        $region36: #{tpu_custom_call.1} parent=27 // pred_fallthru
          _
      $region28: #{tpu_custom_call.1} parent=5 // pred_fallthru
        _
      %p254 = scmp.le.s32.totalorder 1, %s21
      %p255 = scmp.lt.s32.totalorder %s21, 3
      %p256 = pnand %p254, %p255
      %p257 = pneg %p256
      // Predicated region
      $region37: #{tpu_custom_call.1} parent=5 // pred_check
        _
      $region38: #{tpu_custom_call.1} parent=5 // pred_check_branch
        %259 = sbr.rel (%p256) target = $region40
      $region39: #{tpu_custom_call.1} parent=5 // pred_region
        %s260 = ssub.s32 %s21, 1
        %s261 = sand.u32 %s34, 1
        %s262 = scalar_lea.sflag [#allocation3], %s261
        %s263 = sand.u32 %s34, 1
        %s264 = smul.addr %s263, 512
        %s265 = scalar_lea.vmem [#allocation2], %s264
        // Predicated region
        $region41: #{tpu_custom_call.1} parent=39 // pred_check
          %p266 = pneg %p47
        $region42: #{tpu_custom_call.1} parent=39 // pred_check_branch
          %268 = sbr.rel (%p266) target = $region44
        $region43: #{tpu_custom_call.1} parent=39 // pred_region
          %269 = dma.done %s262, 8192
        $region44: #{tpu_custom_call.1} parent=39 // pred_fallthru
          _
        %s270 = sand.u32 %s26, 1
        %s271 = scalar_lea.sflag [#allocation6], %s270
        %s272 = sand.u32 %s60, 1
        %s273 = smul.addr %s272, 768
        %s274 = scalar_lea.vmem [#allocation5], %s273
        // Predicated region
        $region45: #{tpu_custom_call.1} parent=39 // pred_check
          %p275 = pneg %p73
        $region46: #{tpu_custom_call.1} parent=39 // pred_check_branch
          %277 = sbr.rel (%p275) target = $region48
        $region47: #{tpu_custom_call.1} parent=39 // pred_region
          %278 = dma.done %s271, 12288
        $region48: #{tpu_custom_call.1} parent=39 // pred_fallthru
          _
        // Predicated region
        $region49: #{tpu_custom_call.1} parent=39 // pred_check
          %p279 = pneg %p94
        $region50: #{tpu_custom_call.1} parent=39 // pred_check_branch
          %281 = sbr.rel (%p279) target = $region52
        $region51: #{tpu_custom_call.1} parent=39 // pred_region
          %282 = dma.done [#allocation6], 6144
        $region52: #{tpu_custom_call.1} parent=39 // pred_fallthru
          _
        // Predicated region
        $region53: #{tpu_custom_call.1} parent=39 // pred_check
          %p283 = pneg %p115
        $region54: #{tpu_custom_call.1} parent=39 // pred_check_branch
          %285 = sbr.rel (%p283) target = $region56
        $region55: #{tpu_custom_call.1} parent=39 // pred_region
          %286 = dma.done [#allocation9], 9216
        $region56: #{tpu_custom_call.1} parent=39 // pred_fallthru
          _
        %s287 = sand.u32 %s34, 1
        %s288 = scalar_lea.sflag [#allocation3], %s287
        %s289 = sand.u32 %s34, 1
        %s290 = smul.addr %s289, 512
        %s291 = scalar_lea.vmem [#allocation2], %s290
        %p292 = pneg %p47
        %p293 = pneg %p44
        %s294 = sand.u32 %s26, 1
        %s295 = scalar_lea.sflag [#allocation6], %s294
        %s296 = sand.u32 %s60, 1
        %s297 = smul.addr %s296, 768
        %s298 = scalar_lea.vmem [#allocation5], %s297
        %p299 = pneg %p73
        %p300 = pneg %p70
        %p301 = pneg %p94
        %p302 = pneg %p91
        %p303 = pneg %p115
        %p304 = pneg %p112
        %p305 = pneg %p136
        %p306 = pneg %p133
        %p307 = pneg %p162
        %p308 = pneg %p159
        %s309 = sand.u32 %s149, 1
        %s310 = scalar_lea.sflag [#allocation4], %s309
        %s311 = sand.u32 %s149, 1
        %s312 = smul.addr %s311, 768
        %s313 = scalar_lea.vmem [#allocation10], %s312
        %s314 = smul.u32 32, %s26
        %s315 = smul.u32 32, %s26
        %s316 = smul.u32 32, %s26
        %v318 = vld [vmem:[%s265] sm:$0xff]
        %v319 = vld [vmem:[%s265 + $0x8] sm:$0xff]
        %v320 = vld [vmem:[%s265 + $0x10] sm:$0xff]
        %v321 = vld [vmem:[%s265 + $0x18] sm:$0xff]
        %v322 = vld [vmem:[%s265 + $0x20] sm:$0xff]
        %v323 = vld [vmem:[%s265 + $0x28] sm:$0xff]
        %v324 = vld [vmem:[%s265 + $0x30] sm:$0xff]
        %v325 = vld [vmem:[%s265 + $0x38] sm:$0xff]
        %v326 = vld [vmem:[%s265 + $0x40] sm:$0xff]
        %v327 = vld [vmem:[%s265 + $0x48] sm:$0xff]
        %v328 = vld [vmem:[%s265 + $0x50] sm:$0xff]
        %v329 = vld [vmem:[%s265 + $0x58] sm:$0xff]
        %v330 = vld [vmem:[%s265 + $0x60] sm:$0xff]
        %v331 = vld [vmem:[%s265 + $0x68] sm:$0xff]
        %v332 = vld [vmem:[%s265 + $0x70] sm:$0xff]
        %v333 = vld [vmem:[%s265 + $0x78] sm:$0xff]
        %v334 = vld [vmem:[%s265 + $0x80] sm:$0xff]
        %v335 = vld [vmem:[%s265 + $0x88] sm:$0xff]
        %v336 = vld [vmem:[%s265 + $0x90] sm:$0xff]
        %v337 = vld [vmem:[%s265 + $0x98] sm:$0xff]
        %v338 = vld [vmem:[%s265 + $0xa0] sm:$0xff]
        %v339 = vld [vmem:[%s265 + $0xa8] sm:$0xff]
        %v340 = vld [vmem:[%s265 + $0xb0] sm:$0xff]
        %v341 = vld [vmem:[%s265 + $0xb8] sm:$0xff]
        %v342 = vld [vmem:[%s265 + $0xc0] sm:$0xff]
        %v343 = vld [vmem:[%s265 + $0xc8] sm:$0xff]
        %v344 = vld [vmem:[%s265 + $0xd0] sm:$0xff]
        %v345 = vld [vmem:[%s265 + $0xd8] sm:$0xff]
        %v346 = vld [vmem:[%s265 + $0xe0] sm:$0xff]
        %v347 = vld [vmem:[%s265 + $0xe8] sm:$0xff]
        %v348 = vld [vmem:[%s265 + $0xf0] sm:$0xff]
        %v349 = vld [vmem:[%s265 + $0xf8] sm:$0xff]
        %v350 = vld [vmem:[%s265 + $0x100] sm:$0xff]
        %v351 = vld [vmem:[%s265 + $0x108] sm:$0xff]
        %v352 = vld [vmem:[%s265 + $0x110] sm:$0xff]
        %v353 = vld [vmem:[%s265 + $0x118] sm:$0xff]
        %v354 = vld [vmem:[%s265 + $0x120] sm:$0xff]
        %v355 = vld [vmem:[%s265 + $0x128] sm:$0xff]
        %v356 = vld [vmem:[%s265 + $0x130] sm:$0xff]
        %v357 = vld [vmem:[%s265 + $0x138] sm:$0xff]
        %v358 = vld [vmem:[%s265 + $0x140] sm:$0xff]
        %v359 = vld [vmem:[%s265 + $0x148] sm:$0xff]
        %v360 = vld [vmem:[%s265 + $0x150] sm:$0xff]
        %v361 = vld [vmem:[%s265 + $0x158] sm:$0xff]
        %v362 = vld [vmem:[%s265 + $0x160] sm:$0xff]
        %v363 = vld [vmem:[%s265 + $0x168] sm:$0xff]
        %v364 = vld [vmem:[%s265 + $0x170] sm:$0xff]
        %v365 = vld [vmem:[%s265 + $0x178] sm:$0xff]
        %v366 = vld [vmem:[%s265 + $0x180] sm:$0xff]
        %v367 = vld [vmem:[%s265 + $0x188] sm:$0xff]
        %v368 = vld [vmem:[%s265 + $0x190] sm:$0xff]
        %v369 = vld [vmem:[%s265 + $0x198] sm:$0xff]
        %v370 = vld [vmem:[%s265 + $0x1a0] sm:$0xff]
        %v371 = vld [vmem:[%s265 + $0x1a8] sm:$0xff]
        %v372 = vld [vmem:[%s265 + $0x1b0] sm:$0xff]
        %v373 = vld [vmem:[%s265 + $0x1b8] sm:$0xff]
        %v374 = vld [vmem:[%s265 + $0x1c0] sm:$0xff]
        %v375 = vld [vmem:[%s265 + $0x1c8] sm:$0xff]
        %v376 = vld [vmem:[%s265 + $0x1d0] sm:$0xff]
        %v377 = vld [vmem:[%s265 + $0x1d8] sm:$0xff]
        %v378 = vld [vmem:[%s265 + $0x1e0] sm:$0xff]
        %v379 = vld [vmem:[%s265 + $0x1e8] sm:$0xff]
        %v380 = vld [vmem:[%s265 + $0x1f0] sm:$0xff]
        %v381 = vld [vmem:[%s265 + $0x1f8] sm:$0xff]
        %v382 = vpack.c.bf16 %v320, %v318
        %v383 = vpack.c.bf16 %v321, %v319
        %v384 = vpack.c.bf16 %v324, %v322
        %v385 = vpack.c.bf16 %v325, %v323
        %v386 = vpack.c.bf16 %v328, %v326
        %v387 = vpack.c.bf16 %v329, %v327
        %v388 = vpack.c.bf16 %v332, %v330
        %v389 = vpack.c.bf16 %v333, %v331
        %v390 = vpack.c.bf16 %v336, %v334
        %v391 = vpack.c.bf16 %v337, %v335
        %v392 = vpack.c.bf16 %v340, %v338
        %v393 = vpack.c.bf16 %v341, %v339
        %v394 = vpack.c.bf16 %v344, %v342
        %v395 = vpack.c.bf16 %v345, %v343
        %v396 = vpack.c.bf16 %v348, %v346
        %v397 = vpack.c.bf16 %v349, %v347
        %v398 = vpack.c.bf16 %v352, %v350
        %v399 = vpack.c.bf16 %v353, %v351
        %v400 = vpack.c.bf16 %v356, %v354
        %v401 = vpack.c.bf16 %v357, %v355
        %v402 = vpack.c.bf16 %v360, %v358
        %v403 = vpack.c.bf16 %v361, %v359
        %v404 = vpack.c.bf16 %v364, %v362
        %v405 = vpack.c.bf16 %v365, %v363
        %v406 = vpack.c.bf16 %v368, %v366
        %v407 = vpack.c.bf16 %v369, %v367
        %v408 = vpack.c.bf16 %v372, %v370
        %v409 = vpack.c.bf16 %v373, %v371
        %v410 = vpack.c.bf16 %v376, %v374
        %v411 = vpack.c.bf16 %v377, %v375
        %v412 = vpack.c.bf16 %v380, %v378
        %v413 = vpack.c.bf16 %v381, %v379
        %v414 = vld [vmem:[%s274] sm:$0xff]
        %v415 = vld [vmem:[%s274 + $0x8] sm:$0xff]
        %v416 = vld [vmem:[%s274 + $0x10] sm:$0xff]
        %v417 = vld [vmem:[%s274 + $0x18] sm:$0xff]
        %v418 = vld [vmem:[%s274 + $0x20] sm:$0xff]
        %v419 = vld [vmem:[%s274 + $0x28] sm:$0xff]
        %v420 = vld [vmem:[%s274 + $0x30] sm:$0xff]
        %v421 = vld [vmem:[%s274 + $0x38] sm:$0xff]
        %v422 = vld [vmem:[%s274 + $0x40] sm:$0xff]
        %v423 = vld [vmem:[%s274 + $0x48] sm:$0xff]
        %v424 = vld [vmem:[%s274 + $0x50] sm:$0xff]
        %v425 = vld [vmem:[%s274 + $0x58] sm:$0xff]
        %v426 = vld [vmem:[%s274 + $0x60] sm:$0xff]
        %v427 = vld [vmem:[%s274 + $0x68] sm:$0xff]
        %v428 = vld [vmem:[%s274 + $0x70] sm:$0xff]
        %v429 = vld [vmem:[%s274 + $0x78] sm:$0xff]
        %v430 = vld [vmem:[%s274 + $0x80] sm:$0xff]
        %v431 = vld [vmem:[%s274 + $0x88] sm:$0xff]
        %v432 = vld [vmem:[%s274 + $0x90] sm:$0xff]
        %v433 = vld [vmem:[%s274 + $0x98] sm:$0xff]
        %v434 = vld [vmem:[%s274 + $0xa0] sm:$0xff]
        %v435 = vld [vmem:[%s274 + $0xa8] sm:$0xff]
        %v436 = vld [vmem:[%s274 + $0xb0] sm:$0xff]
        %v437 = vld [vmem:[%s274 + $0xb8] sm:$0xff]
        %v438 = vld [vmem:[%s274 + $0xc0] sm:$0xff]
        %v439 = vld [vmem:[%s274 + $0xc8] sm:$0xff]
        %v440 = vld [vmem:[%s274 + $0xd0] sm:$0xff]
        %v441 = vld [vmem:[%s274 + $0xd8] sm:$0xff]
        %v442 = vld [vmem:[%s274 + $0xe0] sm:$0xff]
        %v443 = vld [vmem:[%s274 + $0xe8] sm:$0xff]
        %v444 = vld [vmem:[%s274 + $0xf0] sm:$0xff]
        %v445 = vld [vmem:[%s274 + $0xf8] sm:$0xff]
        %v446 = vld [vmem:[%s274 + $0x100] sm:$0xff]
        %v447 = vld [vmem:[%s274 + $0x108] sm:$0xff]
        %v448 = vld [vmem:[%s274 + $0x110] sm:$0xff]
        %v449 = vld [vmem:[%s274 + $0x118] sm:$0xff]
        %v450 = vld [vmem:[%s274 + $0x120] sm:$0xff]
        %v451 = vld [vmem:[%s274 + $0x128] sm:$0xff]
        %v452 = vld [vmem:[%s274 + $0x130] sm:$0xff]
        %v453 = vld [vmem:[%s274 + $0x138] sm:$0xff]
        %v454 = vld [vmem:[%s274 + $0x140] sm:$0xff]
        %v455 = vld [vmem:[%s274 + $0x148] sm:$0xff]
        %v456 = vld [vmem:[%s274 + $0x150] sm:$0xff]
        %v457 = vld [vmem:[%s274 + $0x158] sm:$0xff]
        %v458 = vld [vmem:[%s274 + $0x160] sm:$0xff]
        %v459 = vld [vmem:[%s274 + $0x168] sm:$0xff]
        %v460 = vld [vmem:[%s274 + $0x170] sm:$0xff]
        %v461 = vld [vmem:[%s274 + $0x178] sm:$0xff]
        %v462 = vld [vmem:[%s274 + $0x180] sm:$0xff]
        %v463 = vld [vmem:[%s274 + $0x188] sm:$0xff]
        %v464 = vld [vmem:[%s274 + $0x190] sm:$0xff]
        %v465 = vld [vmem:[%s274 + $0x198] sm:$0xff]
        %v466 = vld [vmem:[%s274 + $0x1a0] sm:$0xff]
        %v467 = vld [vmem:[%s274 + $0x1a8] sm:$0xff]
        %v468 = vld [vmem:[%s274 + $0x1b0] sm:$0xff]
        %v469 = vld [vmem:[%s274 + $0x1b8] sm:$0xff]
        %v470 = vld [vmem:[%s274 + $0x1c0] sm:$0xff]
        %v471 = vld [vmem:[%s274 + $0x1c8] sm:$0xff]
        %v472 = vld [vmem:[%s274 + $0x1d0] sm:$0xff]
        %v473 = vld [vmem:[%s274 + $0x1d8] sm:$0xff]
        %v474 = vld [vmem:[%s274 + $0x1e0] sm:$0xff]
        %v475 = vld [vmem:[%s274 + $0x1e8] sm:$0xff]
        %v476 = vld [vmem:[%s274 + $0x1f0] sm:$0xff]
        %v477 = vld [vmem:[%s274 + $0x1f8] sm:$0xff]
        %v478 = vld [vmem:[%s274 + $0x200] sm:$0xff]
        %v479 = vld [vmem:[%s274 + $0x208] sm:$0xff]
        %v480 = vld [vmem:[%s274 + $0x210] sm:$0xff]
        %v481 = vld [vmem:[%s274 + $0x218] sm:$0xff]
        %v482 = vld [vmem:[%s274 + $0x220] sm:$0xff]
        %v483 = vld [vmem:[%s274 + $0x228] sm:$0xff]
        %v484 = vld [vmem:[%s274 + $0x230] sm:$0xff]
        %v485 = vld [vmem:[%s274 + $0x238] sm:$0xff]
        %v486 = vld [vmem:[%s274 + $0x240] sm:$0xff]
        %v487 = vld [vmem:[%s274 + $0x248] sm:$0xff]
        %v488 = vld [vmem:[%s274 + $0x250] sm:$0xff]
        %v489 = vld [vmem:[%s274 + $0x258] sm:$0xff]
        %v490 = vld [vmem:[%s274 + $0x260] sm:$0xff]
        %v491 = vld [vmem:[%s274 + $0x268] sm:$0xff]
        %v492 = vld [vmem:[%s274 + $0x270] sm:$0xff]
        %v493 = vld [vmem:[%s274 + $0x278] sm:$0xff]
        %v494 = vld [vmem:[%s274 + $0x280] sm:$0xff]
        %v495 = vld [vmem:[%s274 + $0x288] sm:$0xff]
        %v496 = vld [vmem:[%s274 + $0x290] sm:$0xff]
        %v497 = vld [vmem:[%s274 + $0x298] sm:$0xff]
        %v498 = vld [vmem:[%s274 + $0x2a0] sm:$0xff]
        %v499 = vld [vmem:[%s274 + $0x2a8] sm:$0xff]
        %v500 = vld [vmem:[%s274 + $0x2b0] sm:$0xff]
        %v501 = vld [vmem:[%s274 + $0x2b8] sm:$0xff]
        %v502 = vld [vmem:[%s274 + $0x2c0] sm:$0xff]
        %v503 = vld [vmem:[%s274 + $0x2c8] sm:$0xff]
        %v504 = vld [vmem:[%s274 + $0x2d0] sm:$0xff]
        %v505 = vld [vmem:[%s274 + $0x2d8] sm:$0xff]
        %v506 = vld [vmem:[%s274 + $0x2e0] sm:$0xff]
        %v507 = vld [vmem:[%s274 + $0x2e8] sm:$0xff]
        %v508 = vld [vmem:[%s274 + $0x2f0] sm:$0xff]
        %v509 = vld [vmem:[%s274 + $0x2f8] sm:$0xff]
        %v510 = vpack.c.bf16 %v417, %v414
        %v511 = vpack.c.bf16 %v418, %v415
        %v512 = vpack.c.bf16 %v419, %v416
        %v513 = vpack.c.bf16 %v423, %v420
        %v514 = vpack.c.bf16 %v424, %v421
        %v515 = vpack.c.bf16 %v425, %v422
        %v516 = vpack.c.bf16 %v429, %v426
        %v517 = vpack.c.bf16 %v430, %v427
        %v518 = vpack.c.bf16 %v431, %v428
        %v519 = vpack.c.bf16 %v435, %v432
        %v520 = vpack.c.bf16 %v436, %v433
        %v521 = vpack.c.bf16 %v437, %v434
        %v522 = vpack.c.bf16 %v441, %v438
        %v523 = vpack.c.bf16 %v442, %v439
        %v524 = vpack.c.bf16 %v443, %v440
        %v525 = vpack.c.bf16 %v447, %v444
        %v526 = vpack.c.bf16 %v448, %v445
        %v527 = vpack.c.bf16 %v449, %v446
        %v528 = vpack.c.bf16 %v453, %v450
        %v529 = vpack.c.bf16 %v454, %v451
        %v530 = vpack.c.bf16 %v455, %v452
        %v531 = vpack.c.bf16 %v459, %v456
        %v532 = vpack.c.bf16 %v460, %v457
        %v533 = vpack.c.bf16 %v461, %v458
        %v534 = vpack.c.bf16 %v465, %v462
        %v535 = vpack.c.bf16 %v466, %v463
        %v536 = vpack.c.bf16 %v467, %v464
        %v537 = vpack.c.bf16 %v471, %v468
        %v538 = vpack.c.bf16 %v472, %v469
        %v539 = vpack.c.bf16 %v473, %v470
        %v540 = vpack.c.bf16 %v477, %v474
        %v541 = vpack.c.bf16 %v478, %v475
        %v542 = vpack.c.bf16 %v479, %v476
        %v543 = vpack.c.bf16 %v483, %v480
        %v544 = vpack.c.bf16 %v484, %v481
        %v545 = vpack.c.bf16 %v485, %v482
        %v546 = vpack.c.bf16 %v489, %v486
        %v547 = vpack.c.bf16 %v490, %v487
        %v548 = vpack.c.bf16 %v491, %v488
        %v549 = vpack.c.bf16 %v495, %v492
        %v550 = vpack.c.bf16 %v496, %v493
        %v551 = vpack.c.bf16 %v497, %v494
        %v552 = vpack.c.bf16 %v501, %v498
        %v553 = vpack.c.bf16 %v502, %v499
        %v554 = vpack.c.bf16 %v503, %v500
        %v555 = vpack.c.bf16 %v507, %v504
        %v556 = vpack.c.bf16 %v508, %v505
        %v557 = vpack.c.bf16 %v509, %v506
        %v558 = vld [vmem:[#allocation7] sm:$0xff]
        %v559 = vld [vmem:[#allocation7 + $0x8] sm:$0xf]
        %v560 = vld [vmem:[#allocation7 + $0xc] sm:$0xff]
        %v561 = vld [vmem:[#allocation7 + $0x14] sm:$0xf]
        %v562 = vld [vmem:[#allocation7 + $0x18] sm:$0xff]
        %v563 = vld [vmem:[#allocation7 + $0x20] sm:$0xf]
        %v564 = vld [vmem:[#allocation7 + $0x24] sm:$0xff]
        %v565 = vld [vmem:[#allocation7 + $0x2c] sm:$0xf]
        %v566 = vld [vmem:[#allocation7 + $0x30] sm:$0xff]
        %v567 = vld [vmem:[#allocation7 + $0x38] sm:$0xf]
        %v568 = vld [vmem:[#allocation7 + $0x3c] sm:$0xff]
        %v569 = vld [vmem:[#allocation7 + $0x44] sm:$0xf]
        %v570 = vld [vmem:[#allocation7 + $0x48] sm:$0xff]
        %v571 = vld [vmem:[#allocation7 + $0x50] sm:$0xf]
        %v572 = vld [vmem:[#allocation7 + $0x54] sm:$0xff]
        %v573 = vld [vmem:[#allocation7 + $0x5c] sm:$0xf]
        %v574 = vld [vmem:[#allocation7 + $0x60] sm:$0xff]
        %v575 = vld [vmem:[#allocation7 + $0x68] sm:$0xf]
        %v576 = vld [vmem:[#allocation7 + $0x6c] sm:$0xff]
        %v577 = vld [vmem:[#allocation7 + $0x74] sm:$0xf]
        %v578 = vld [vmem:[#allocation7 + $0x78] sm:$0xff]
        %v579 = vld [vmem:[#allocation7 + $0x80] sm:$0xf]
        %v580 = vld [vmem:[#allocation7 + $0x84] sm:$0xff]
        %v581 = vld [vmem:[#allocation7 + $0x8c] sm:$0xf]
        %v582 = vld [vmem:[#allocation7 + $0x90] sm:$0xff]
        %v583 = vld [vmem:[#allocation7 + $0x98] sm:$0xf]
        %v584 = vld [vmem:[#allocation7 + $0x9c] sm:$0xff]
        %v585 = vld [vmem:[#allocation7 + $0xa4] sm:$0xf]
        %v586 = vld [vmem:[#allocation7 + $0xa8] sm:$0xff]
        %v587 = vld [vmem:[#allocation7 + $0xb0] sm:$0xf]
        %v588 = vld [vmem:[#allocation7 + $0xb4] sm:$0xff]
        %v589 = vld [vmem:[#allocation7 + $0xbc] sm:$0xf]
        %v590 = vld [vmem:[#allocation7 + $0xc0] sm:$0xff]
        %v591 = vld [vmem:[#allocation7 + $0xc8] sm:$0xf]
        %v592 = vld [vmem:[#allocation7 + $0xcc] sm:$0xff]
        %v593 = vld [vmem:[#allocation7 + $0xd4] sm:$0xf]
        %v594 = vld [vmem:[#allocation7 + $0xd8] sm:$0xff]
        %v595 = vld [vmem:[#allocation7 + $0xe0] sm:$0xf]
        %v596 = vld [vmem:[#allocation7 + $0xe4] sm:$0xff]
        %v597 = vld [vmem:[#allocation7 + $0xec] sm:$0xf]
        %v598 = vld [vmem:[#allocation7 + $0xf0] sm:$0xff]
        %v599 = vld [vmem:[#allocation7 + $0xf8] sm:$0xf]
        %v600 = vld [vmem:[#allocation7 + $0xfc] sm:$0xff]
        %v601 = vld [vmem:[#allocation7 + $0x104] sm:$0xf]
        %v602 = vld [vmem:[#allocation7 + $0x108] sm:$0xff]
        %v603 = vld [vmem:[#allocation7 + $0x110] sm:$0xf]
        %v604 = vld [vmem:[#allocation7 + $0x114] sm:$0xff]
        %v605 = vld [vmem:[#allocation7 + $0x11c] sm:$0xf]
        %v606 = vld [vmem:[#allocation7 + $0x120] sm:$0xff]
        %v607 = vld [vmem:[#allocation7 + $0x128] sm:$0xf]
        %v608 = vld [vmem:[#allocation7 + $0x12c] sm:$0xff]
        %v609 = vld [vmem:[#allocation7 + $0x134] sm:$0xf]
        %v610 = vld [vmem:[#allocation7 + $0x138] sm:$0xff]
        %v611 = vld [vmem:[#allocation7 + $0x140] sm:$0xf]
        %v612 = vld [vmem:[#allocation7 + $0x144] sm:$0xff]
        %v613 = vld [vmem:[#allocation7 + $0x14c] sm:$0xf]
        %v614 = vld [vmem:[#allocation7 + $0x150] sm:$0xff]
        %v615 = vld [vmem:[#allocation7 + $0x158] sm:$0xf]
        %v616 = vld [vmem:[#allocation7 + $0x15c] sm:$0xff]
        %v617 = vld [vmem:[#allocation7 + $0x164] sm:$0xf]
        %v618 = vld [vmem:[#allocation7 + $0x168] sm:$0xff]
        %v619 = vld [vmem:[#allocation7 + $0x170] sm:$0xf]
        %v620 = vld [vmem:[#allocation7 + $0x174] sm:$0xff]
        %v621 = vld [vmem:[#allocation7 + $0x17c] sm:$0xf]
        %v622 = vld [vmem:[#allocation8] sm:$0xff]
        %v623 = vld [vmem:[#allocation8 + $0x8] sm:$0xf]
        %v624 = vld [vmem:[#allocation8 + $0xc] sm:$0xff]
        %v625 = vld [vmem:[#allocation8 + $0x14] sm:$0xf]
        %v626 = vld [vmem:[#allocation8 + $0x18] sm:$0xff]
        %v627 = vld [vmem:[#allocation8 + $0x20] sm:$0xf]
        %v628 = vld [vmem:[#allocation8 + $0x24] sm:$0xff]
        %v629 = vld [vmem:[#allocation8 + $0x2c] sm:$0xf]
        %v630 = vld [vmem:[#allocation8 + $0x30] sm:$0xff]
        %v631 = vld [vmem:[#allocation8 + $0x38] sm:$0xf]
        %v632 = vld [vmem:[#allocation8 + $0x3c] sm:$0xff]
        %v633 = vld [vmem:[#allocation8 + $0x44] sm:$0xf]
        %v634 = vld [vmem:[#allocation8 + $0x48] sm:$0xff]
        %v635 = vld [vmem:[#allocation8 + $0x50] sm:$0xf]
        %v636 = vld [vmem:[#allocation8 + $0x54] sm:$0xff]
        %v637 = vld [vmem:[#allocation8 + $0x5c] sm:$0xf]
        %v638 = vld [vmem:[#allocation8 + $0x60] sm:$0xff]
        %v639 = vld [vmem:[#allocation8 + $0x68] sm:$0xf]
        %v640 = vld [vmem:[#allocation8 + $0x6c] sm:$0xff]
        %v641 = vld [vmem:[#allocation8 + $0x74] sm:$0xf]
        %v642 = vld [vmem:[#allocation8 + $0x78] sm:$0xff]
        %v643 = vld [vmem:[#allocation8 + $0x80] sm:$0xf]
        %v644 = vld [vmem:[#allocation8 + $0x84] sm:$0xff]
        %v645 = vld [vmem:[#allocation8 + $0x8c] sm:$0xf]
        %v646 = vld [vmem:[#allocation8 + $0x90] sm:$0xff]
        %v647 = vld [vmem:[#allocation8 + $0x98] sm:$0xf]
        %v648 = vld [vmem:[#allocation8 + $0x9c] sm:$0xff]
        %v649 = vld [vmem:[#allocation8 + $0xa4] sm:$0xf]
        %v650 = vld [vmem:[#allocation8 + $0xa8] sm:$0xff]
        %v651 = vld [vmem:[#allocation8 + $0xb0] sm:$0xf]
        %v652 = vld [vmem:[#allocation8 + $0xb4] sm:$0xff]
        %v653 = vld [vmem:[#allocation8 + $0xbc] sm:$0xf]
        %v654 = vld [vmem:[#allocation8 + $0xc0] sm:$0xff]
        %v655 = vld [vmem:[#allocation8 + $0xc8] sm:$0xf]
        %v656 = vld [vmem:[#allocation8 + $0xcc] sm:$0xff]
        %v657 = vld [vmem:[#allocation8 + $0xd4] sm:$0xf]
        %v658 = vld [vmem:[#allocation8 + $0xd8] sm:$0xff]
        %v659 = vld [vmem:[#allocation8 + $0xe0] sm:$0xf]
        %v660 = vld [vmem:[#allocation8 + $0xe4] sm:$0xff]
        %v661 = vld [vmem:[#allocation8 + $0xec] sm:$0xf]
        %v662 = vld [vmem:[#allocation8 + $0xf0] sm:$0xff]
        %v663 = vld [vmem:[#allocation8 + $0xf8] sm:$0xf]
        %v664 = vld [vmem:[#allocation8 + $0xfc] sm:$0xff]
        %v665 = vld [vmem:[#allocation8 + $0x104] sm:$0xf]
        %v666 = vld [vmem:[#allocation8 + $0x108] sm:$0xff]
        %v667 = vld [vmem:[#allocation8 + $0x110] sm:$0xf]
        %v668 = vld [vmem:[#allocation8 + $0x114] sm:$0xff]
        %v669 = vld [vmem:[#allocation8 + $0x11c] sm:$0xf]
        %v670 = vld [vmem:[#allocation8 + $0x120] sm:$0xff]
        %v671 = vld [vmem:[#allocation8 + $0x128] sm:$0xf]
        %v672 = vld [vmem:[#allocation8 + $0x12c] sm:$0xff]
        %v673 = vld [vmem:[#allocation8 + $0x134] sm:$0xf]
        %v674 = vld [vmem:[#allocation8 + $0x138] sm:$0xff]
        %v675 = vld [vmem:[#allocation8 + $0x140] sm:$0xf]
        %v676 = vld [vmem:[#allocation8 + $0x144] sm:$0xff]
        %v677 = vld [vmem:[#allocation8 + $0x14c] sm:$0xf]
        %v678 = vld [vmem:[#allocation8 + $0x150] sm:$0xff]
        %v679 = vld [vmem:[#allocation8 + $0x158] sm:$0xf]
        %v680 = vld [vmem:[#allocation8 + $0x15c] sm:$0xff]
        %v681 = vld [vmem:[#allocation8 + $0x164] sm:$0xf]
        %v682 = vld [vmem:[#allocation8 + $0x168] sm:$0xff]
        %v683 = vld [vmem:[#allocation8 + $0x170] sm:$0xf]
        %v684 = vld [vmem:[#allocation8 + $0x174] sm:$0xff]
        %v685 = vld [vmem:[#allocation8 + $0x17c] sm:$0xf]
        %v686 = vld [vmem:[#allocation8 + $0x180] sm:$0xff]
        %v687 = vld [vmem:[#allocation8 + $0x188] sm:$0xf]
        %v688 = vld [vmem:[#allocation8 + $0x18c] sm:$0xff]
        %v689 = vld [vmem:[#allocation8 + $0x194] sm:$0xf]
        %v690 = vld [vmem:[#allocation8 + $0x198] sm:$0xff]
        %v691 = vld [vmem:[#allocation8 + $0x1a0] sm:$0xf]
        %v692 = vld [vmem:[#allocation8 + $0x1a4] sm:$0xff]
        %v693 = vld [vmem:[#allocation8 + $0x1ac] sm:$0xf]
        %v694 = vld [vmem:[#allocation8 + $0x1b0] sm:$0xff]
        %v695 = vld [vmem:[#allocation8 + $0x1b8] sm:$0xf]
        %v696 = vld [vmem:[#allocation8 + $0x1bc] sm:$0xff]
        %v697 = vld [vmem:[#allocation8 + $0x1c4] sm:$0xf]
        %v698 = vld [vmem:[#allocation8 + $0x1c8] sm:$0xff]
        %v699 = vld [vmem:[#allocation8 + $0x1d0] sm:$0xf]
        %v700 = vld [vmem:[#allocation8 + $0x1d4] sm:$0xff]
        %v701 = vld [vmem:[#allocation8 + $0x1dc] sm:$0xf]
        %v702 = vld [vmem:[#allocation8 + $0x1e0] sm:$0xff]
        %v703 = vld [vmem:[#allocation8 + $0x1e8] sm:$0xf]
        %v704 = vld [vmem:[#allocation8 + $0x1ec] sm:$0xff]
        %v705 = vld [vmem:[#allocation8 + $0x1f4] sm:$0xf]
        %v706 = vld [vmem:[#allocation8 + $0x1f8] sm:$0xff]
        %v707 = vld [vmem:[#allocation8 + $0x200] sm:$0xf]
        %v708 = vld [vmem:[#allocation8 + $0x204] sm:$0xff]
        %v709 = vld [vmem:[#allocation8 + $0x20c] sm:$0xf]
        %v710 = vld [vmem:[#allocation8 + $0x210] sm:$0xff]
        %v711 = vld [vmem:[#allocation8 + $0x218] sm:$0xf]
        %v712 = vld [vmem:[#allocation8 + $0x21c] sm:$0xff]
        %v713 = vld [vmem:[#allocation8 + $0x224] sm:$0xf]
        %v714 = vld [vmem:[#allocation8 + $0x228] sm:$0xff]
        %v715 = vld [vmem:[#allocation8 + $0x230] sm:$0xf]
        %v716 = vld [vmem:[#allocation8 + $0x234] sm:$0xff]
        %v717 = vld [vmem:[#allocation8 + $0x23c] sm:$0xf]
        %v814 = vunpack.c.l.b16 %v622
        %v815 = vunpack.c.h.b16 %v622
        %v816 = vunpack.c.l.b16 %v623
        %v817 = vunpack.c.l.b16 %v624
        %v818 = vunpack.c.h.b16 %v624
        %v819 = vunpack.c.l.b16 %v625
        %v820 = vunpack.c.l.b16 %v626
        %v821 = vunpack.c.h.b16 %v626
        %v822 = vunpack.c.l.b16 %v627
        %v823 = vunpack.c.l.b16 %v628
        %v824 = vunpack.c.h.b16 %v628
        %v825 = vunpack.c.l.b16 %v629
        %v826 = vunpack.c.l.b16 %v630
        %v827 = vunpack.c.h.b16 %v630
        %v828 = vunpack.c.l.b16 %v631
        %v829 = vunpack.c.l.b16 %v632
        %v830 = vunpack.c.h.b16 %v632
        %v831 = vunpack.c.l.b16 %v633
        %v832 = vunpack.c.l.b16 %v634
        %v833 = vunpack.c.h.b16 %v634
        %v834 = vunpack.c.l.b16 %v635
        %v835 = vunpack.c.l.b16 %v636
        %v836 = vunpack.c.h.b16 %v636
        %v837 = vunpack.c.l.b16 %v637
        %v838 = vunpack.c.l.b16 %v638
        %v839 = vunpack.c.h.b16 %v638
        %v840 = vunpack.c.l.b16 %v639
        %v841 = vunpack.c.l.b16 %v640
        %v842 = vunpack.c.h.b16 %v640
        %v843 = vunpack.c.l.b16 %v641
        %v844 = vunpack.c.l.b16 %v642
        %v845 = vunpack.c.h.b16 %v642
        %v846 = vunpack.c.l.b16 %v643
        %v847 = vunpack.c.l.b16 %v644
        %v848 = vunpack.c.h.b16 %v644
        %v849 = vunpack.c.l.b16 %v645
        %v850 = vunpack.c.l.b16 %v646
        %v851 = vunpack.c.h.b16 %v646
        %v852 = vunpack.c.l.b16 %v647
        %v853 = vunpack.c.l.b16 %v648
        %v854 = vunpack.c.h.b16 %v648
        %v855 = vunpack.c.l.b16 %v649
        %v856 = vunpack.c.l.b16 %v650
        %v857 = vunpack.c.h.b16 %v650
        %v858 = vunpack.c.l.b16 %v651
        %v859 = vunpack.c.l.b16 %v652
        %v860 = vunpack.c.h.b16 %v652
        %v861 = vunpack.c.l.b16 %v653
        %v862 = vunpack.c.l.b16 %v654
        %v863 = vunpack.c.h.b16 %v654
        %v864 = vunpack.c.l.b16 %v655
        %v865 = vunpack.c.l.b16 %v656
        %v866 = vunpack.c.h.b16 %v656
        %v867 = vunpack.c.l.b16 %v657
        %v868 = vunpack.c.l.b16 %v658
        %v869 = vunpack.c.h.b16 %v658
        %v870 = vunpack.c.l.b16 %v659
        %v871 = vunpack.c.l.b16 %v660
        %v872 = vunpack.c.h.b16 %v660
        %v873 = vunpack.c.l.b16 %v661
        %v874 = vunpack.c.l.b16 %v662
        %v875 = vunpack.c.h.b16 %v662
        %v876 = vunpack.c.l.b16 %v663
        %v877 = vunpack.c.l.b16 %v664
        %v878 = vunpack.c.h.b16 %v664
        %v879 = vunpack.c.l.b16 %v665
        %v880 = vunpack.c.l.b16 %v666
        %v881 = vunpack.c.h.b16 %v666
        %v882 = vunpack.c.l.b16 %v667
        %v883 = vunpack.c.l.b16 %v668
        %v884 = vunpack.c.h.b16 %v668
        %v885 = vunpack.c.l.b16 %v669
        %v886 = vunpack.c.l.b16 %v670
        %v887 = vunpack.c.h.b16 %v670
        %v888 = vunpack.c.l.b16 %v671
        %v889 = vunpack.c.l.b16 %v672
        %v890 = vunpack.c.h.b16 %v672
        %v891 = vunpack.c.l.b16 %v673
        %v892 = vunpack.c.l.b16 %v674
        %v893 = vunpack.c.h.b16 %v674
        %v894 = vunpack.c.l.b16 %v675
        %v895 = vunpack.c.l.b16 %v676
        %v896 = vunpack.c.h.b16 %v676
        %v897 = vunpack.c.l.b16 %v677
        %v898 = vunpack.c.l.b16 %v678
        %v899 = vunpack.c.h.b16 %v678
        %v900 = vunpack.c.l.b16 %v679
        %v901 = vunpack.c.l.b16 %v680
        %v902 = vunpack.c.h.b16 %v680
        %v903 = vunpack.c.l.b16 %v681
        %v904 = vunpack.c.l.b16 %v682
        %v905 = vunpack.c.h.b16 %v682
        %v906 = vunpack.c.l.b16 %v683
        %v907 = vunpack.c.l.b16 %v684
        %v908 = vunpack.c.h.b16 %v684
        %v909 = vunpack.c.l.b16 %v685
        %v910 = vunpack.c.l.b16 %v686
        %v911 = vunpack.c.h.b16 %v686
        %v912 = vunpack.c.l.b16 %v687
        %v913 = vunpack.c.l.b16 %v688
        %v914 = vunpack.c.h.b16 %v688
        %v915 = vunpack.c.l.b16 %v689
        %v916 = vunpack.c.l.b16 %v690
        %v917 = vunpack.c.h.b16 %v690
        %v918 = vunpack.c.l.b16 %v691
        %v919 = vunpack.c.l.b16 %v692
        %v920 = vunpack.c.h.b16 %v692
        %v921 = vunpack.c.l.b16 %v693
        %v922 = vunpack.c.l.b16 %v694
        %v923 = vunpack.c.h.b16 %v694
        %v924 = vunpack.c.l.b16 %v695
        %v925 = vunpack.c.l.b16 %v696
        %v926 = vunpack.c.h.b16 %v696
        %v927 = vunpack.c.l.b16 %v697
        %v928 = vunpack.c.l.b16 %v698
        %v929 = vunpack.c.h.b16 %v698
        %v930 = vunpack.c.l.b16 %v699
        %v931 = vunpack.c.l.b16 %v700
        %v932 = vunpack.c.h.b16 %v700
        %v933 = vunpack.c.l.b16 %v701
        %v934 = vunpack.c.l.b16 %v702
        %v935 = vunpack.c.h.b16 %v702
        %v936 = vunpack.c.l.b16 %v703
        %v937 = vunpack.c.l.b16 %v704
        %v938 = vunpack.c.h.b16 %v704
        %v939 = vunpack.c.l.b16 %v705
        %v940 = vunpack.c.l.b16 %v706
        %v941 = vunpack.c.h.b16 %v706
        %v942 = vunpack.c.l.b16 %v707
        %v943 = vunpack.c.l.b16 %v708
        %v944 = vunpack.c.h.b16 %v708
        %v945 = vunpack.c.l.b16 %v709
        %v946 = vunpack.c.l.b16 %v710
        %v947 = vunpack.c.h.b16 %v710
        %v948 = vunpack.c.l.b16 %v711
        %v949 = vunpack.c.l.b16 %v712
        %v950 = vunpack.c.h.b16 %v712
        %v951 = vunpack.c.l.b16 %v713
        %v952 = vunpack.c.l.b16 %v714
        %v953 = vunpack.c.h.b16 %v714
        %v954 = vunpack.c.l.b16 %v715
        %v955 = vunpack.c.l.b16 %v716
        %v956 = vunpack.c.h.b16 %v716
        %v957 = vunpack.c.l.b16 %v717
        %v958 = vpack.c.b16 %v817, %v814
        %v959 = vpack.c.b16 %v818, %v815
        %v960 = vpack.c.b16 %v819, %v816
        %v961 = vpack.c.b16 %v823, %v820
        %v962 = vpack.c.b16 %v824, %v821
        %v963 = vpack.c.b16 %v825, %v822
        %v964 = vpack.c.b16 %v829, %v826
        %v965 = vpack.c.b16 %v830, %v827
        %v966 = vpack.c.b16 %v831, %v828
        %v967 = vpack.c.b16 %v835, %v832
        %v968 = vpack.c.b16 %v836, %v833
        %v969 = vpack.c.b16 %v837, %v834
        %v970 = vpack.c.b16 %v841, %v838
        %v971 = vpack.c.b16 %v842, %v839
        %v972 = vpack.c.b16 %v843, %v840
        %v973 = vpack.c.b16 %v847, %v844
        %v974 = vpack.c.b16 %v848, %v845
        %v975 = vpack.c.b16 %v849, %v846
        %v976 = vpack.c.b16 %v853, %v850
        %v977 = vpack.c.b16 %v854, %v851
        %v978 = vpack.c.b16 %v855, %v852
        %v979 = vpack.c.b16 %v859, %v856
        %v980 = vpack.c.b16 %v860, %v857
        %v981 = vpack.c.b16 %v861, %v858
        %v982 = vpack.c.b16 %v865, %v862
        %v983 = vpack.c.b16 %v866, %v863
        %v984 = vpack.c.b16 %v867, %v864
        %v985 = vpack.c.b16 %v871, %v868
        %v986 = vpack.c.b16 %v872, %v869
        %v987 = vpack.c.b16 %v873, %v870
        %v988 = vpack.c.b16 %v877, %v874
        %v989 = vpack.c.b16 %v878, %v875
        %v990 = vpack.c.b16 %v879, %v876
        %v991 = vpack.c.b16 %v883, %v880
        %v992 = vpack.c.b16 %v884, %v881
        %v993 = vpack.c.b16 %v885, %v882
        %v994 = vpack.c.b16 %v889, %v886
        %v995 = vpack.c.b16 %v890, %v887
        %v996 = vpack.c.b16 %v891, %v888
        %v997 = vpack.c.b16 %v895, %v892
        %v998 = vpack.c.b16 %v896, %v893
        %v999 = vpack.c.b16 %v897, %v894
        %v1000 = vpack.c.b16 %v901, %v898
        %v1001 = vpack.c.b16 %v902, %v899
        %v1002 = vpack.c.b16 %v903, %v900
        %v1003 = vpack.c.b16 %v907, %v904
        %v1004 = vpack.c.b16 %v908, %v905
        %v1005 = vpack.c.b16 %v909, %v906
        %v1006 = vpack.c.b16 %v913, %v910
        %v1007 = vpack.c.b16 %v914, %v911
        %v1008 = vpack.c.b16 %v915, %v912
        %v1009 = vpack.c.b16 %v919, %v916
        %v1010 = vpack.c.b16 %v920, %v917
        %v1011 = vpack.c.b16 %v921, %v918
        %v1012 = vpack.c.b16 %v925, %v922
        %v1013 = vpack.c.b16 %v926, %v923
        %v1014 = vpack.c.b16 %v927, %v924
        %v1015 = vpack.c.b16 %v931, %v928
        %v1016 = vpack.c.b16 %v932, %v929
        %v1017 = vpack.c.b16 %v933, %v930
        %v1018 = vpack.c.b16 %v937, %v934
        %v1019 = vpack.c.b16 %v938, %v935
        %v1020 = vpack.c.b16 %v939, %v936
        %v1021 = vpack.c.b16 %v943, %v940
        %v1022 = vpack.c.b16 %v944, %v941
        %v1023 = vpack.c.b16 %v945, %v942
        %v1024 = vpack.c.b16 %v949, %v946
        %v1025 = vpack.c.b16 %v950, %v947
        %v1026 = vpack.c.b16 %v951, %v948
        %v1027 = vpack.c.b16 %v955, %v952
        %v1028 = vpack.c.b16 %v956, %v953
        %v1029 = vpack.c.b16 %v957, %v954
        %1102 = vmatprep.subr.bf16.mxu0 %v980
        %1103 = vmatpush1.bf16.msra.mxu0 %v979
        %1104 = vmatprep.subr.bf16.mxu0 %v977
        %1105 = vmatpush1.bf16.msra.mxu0 %v976
        %1106 = vmatprep.subr.bf16.mxu0 %v974
        %1107 = vmatpush1.bf16.msra.mxu0 %v973
        %1108 = vmatprep.subr.bf16.mxu0 %v971
        %1109 = vmatpush1.bf16.msra.mxu0 %v970
        %1110 = vmatprep.subr.bf16.mxu0 %v968
        %1111 = vmatpush1.bf16.msra.mxu0 %v967
        %1112 = vmatprep.subr.bf16.mxu0 %v965
        %1113 = vmatpush1.bf16.msra.mxu0 %v964
        %1114 = vmatprep.subr.bf16.mxu0 %v962
        %1115 = vmatpush1.bf16.msra.mxu0 %v961
        %1116 = vmatprep.subr.bf16.mxu0 %v959
        %1117 = vmatpush1.bf16.msra.mxu0 %v958
        %1118 = vmatprep.subr.bf16.mxu0 %v1004
        %1119 = vmatpush2.bf16.msra.mxu0 %v1003
        %1120 = vmatprep.subr.bf16.mxu0 %v1001
        %1121 = vmatpush2.bf16.msra.mxu0 %v1000
        %1122 = vmatprep.subr.bf16.mxu0 %v998
        %1123 = vmatpush2.bf16.msra.mxu0 %v997
        %1124 = vmatprep.subr.bf16.mxu0 %v995
        %1125 = vmatpush2.bf16.msra.mxu0 %v994
        %1126 = vmatprep.subr.bf16.mxu0 %v992
        %1127 = vmatpush2.bf16.msra.mxu0 %v991
        %1128 = vmatprep.subr.bf16.mxu0 %v989
        %1129 = vmatpush2.bf16.msra.mxu0 %v988
        %1130 = vmatprep.subr.bf16.mxu0 %v986
        %1131 = vmatpush2.bf16.msra.mxu0 %v985
        %1132 = vmatprep.subr.bf16.mxu0 %v983
        %1133 = vmatpush2.bf16.msra.mxu0 %v982
        %1134 = vmatprep.mubr.bf16.mxu0 %v511
        %1135 = vmatmul.mubr.bf16.gmra.mxu0 %v510
        %v1136 = vpop.f32.mrf.mxu0
        %v1137 = vadd.f32 0.0, %v1136
        %v1138 = vpop.f32.mrf.mxu0
        %v1139 = vadd.f32 0.0, %v1138
        %v1140 = vpop.f32.mrf.mxu0
        %v1141 = vadd.f32 0.0, %v1140
        %v1142 = vpop.f32.mrf.mxu0
        %v1143 = vadd.f32 0.0, %v1142
        %1144 = vmatprep.mubr.bf16.mxu0 %v514
        %1145 = vmatmul.mubr.bf16.gmra.mxu0 %v513
        %v1146 = vpop.f32.mrf.mxu0
        %v1147 = vadd.f32 0.0, %v1146
        %v1148 = vpop.f32.mrf.mxu0
        %v1149 = vadd.f32 0.0, %v1148
        %v1150 = vpop.f32.mrf.mxu0
        %v1151 = vadd.f32 0.0, %v1150
        %v1152 = vpop.f32.mrf.mxu0
        %v1153 = vadd.f32 0.0, %v1152
        %1154 = vmatprep.mubr.bf16.mxu0 %v517
        %1155 = vmatmul.mubr.bf16.gmra.mxu0 %v516
        %v1156 = vpop.f32.mrf.mxu0
        %v1157 = vadd.f32 0.0, %v1156
        %v1158 = vpop.f32.mrf.mxu0
        %v1159 = vadd.f32 0.0, %v1158
        %v1160 = vpop.f32.mrf.mxu0
        %v1161 = vadd.f32 0.0, %v1160
        %v1162 = vpop.f32.mrf.mxu0
        %v1163 = vadd.f32 0.0, %v1162
        %1164 = vmatprep.mubr.bf16.mxu0 %v520
        %1165 = vmatmul.mubr.bf16.gmra.mxu0 %v519
        %v1166 = vpop.f32.mrf.mxu0
        %v1167 = vadd.f32 0.0, %v1166
        %v1168 = vpop.f32.mrf.mxu0
        %v1169 = vadd.f32 0.0, %v1168
        %v1170 = vpop.f32.mrf.mxu0
        %v1171 = vadd.f32 0.0, %v1170
        %v1172 = vpop.f32.mrf.mxu0
        %v1173 = vadd.f32 0.0, %v1172
        %1174 = vmatprep.mubr.bf16.mxu0 %v523
        %1175 = vmatmul.mubr.bf16.gmra.mxu0 %v522
        %v1176 = vpop.f32.mrf.mxu0
        %v1177 = vadd.f32 0.0, %v1176
        %v1178 = vpop.f32.mrf.mxu0
        %v1179 = vadd.f32 0.0, %v1178
        %v1180 = vpop.f32.mrf.mxu0
        %v1181 = vadd.f32 0.0, %v1180
        %v1182 = vpop.f32.mrf.mxu0
        %v1183 = vadd.f32 0.0, %v1182
        %1184 = vmatprep.mubr.bf16.mxu0 %v526
        %1185 = vmatmul.mubr.bf16.gmra.mxu0 %v525
        %v1186 = vpop.f32.mrf.mxu0
        %v1187 = vadd.f32 0.0, %v1186
        %v1188 = vpop.f32.mrf.mxu0
        %v1189 = vadd.f32 0.0, %v1188
        %v1190 = vpop.f32.mrf.mxu0
        %v1191 = vadd.f32 0.0, %v1190
        %v1192 = vpop.f32.mrf.mxu0
        %v1193 = vadd.f32 0.0, %v1192
        %1194 = vmatprep.mubr.bf16.mxu0 %v529
        %1195 = vmatmul.mubr.bf16.gmra.mxu0 %v528
        %v1196 = vpop.f32.mrf.mxu0
        %v1197 = vadd.f32 0.0, %v1196
        %v1198 = vpop.f32.mrf.mxu0
        %v1199 = vadd.f32 0.0, %v1198
        %v1200 = vpop.f32.mrf.mxu0
        %v1201 = vadd.f32 0.0, %v1200
        %v1202 = vpop.f32.mrf.mxu0
        %v1203 = vadd.f32 0.0, %v1202
        %1204 = vmatprep.mubr.bf16.mxu0 %v532
        %1205 = vmatmul.mubr.bf16.gmra.mxu0 %v531
        %v1206 = vpop.f32.mrf.mxu0
        %v1207 = vadd.f32 0.0, %v1206
        %v1208 = vpop.f32.mrf.mxu0
        %v1209 = vadd.f32 0.0, %v1208
        %v1210 = vpop.f32.mrf.mxu0
        %v1211 = vadd.f32 0.0, %v1210
        %v1212 = vpop.f32.mrf.mxu0
        %v1213 = vadd.f32 0.0, %v1212
        %1214 = vmatprep.mubr.bf16.mxu0 %v535
        %1215 = vmatmul.mubr.bf16.gmra.mxu0 %v534
        %v1216 = vpop.f32.mrf.mxu0
        %v1217 = vadd.f32 0.0, %v1216
        %v1218 = vpop.f32.mrf.mxu0
        %v1219 = vadd.f32 0.0, %v1218
        %v1220 = vpop.f32.mrf.mxu0
        %v1221 = vadd.f32 0.0, %v1220
        %v1222 = vpop.f32.mrf.mxu0
        %v1223 = vadd.f32 0.0, %v1222
        %1224 = vmatprep.mubr.bf16.mxu0 %v538
        %1225 = vmatmul.mubr.bf16.gmra.mxu0 %v537
        %v1226 = vpop.f32.mrf.mxu0
        %v1227 = vadd.f32 0.0, %v1226
        %v1228 = vpop.f32.mrf.mxu0
        %v1229 = vadd.f32 0.0, %v1228
        %v1230 = vpop.f32.mrf.mxu0
        %v1231 = vadd.f32 0.0, %v1230
        %v1232 = vpop.f32.mrf.mxu0
        %v1233 = vadd.f32 0.0, %v1232
        %1234 = vmatprep.mubr.bf16.mxu0 %v541
        %1235 = vmatmul.mubr.bf16.gmra.mxu0 %v540
        %v1236 = vpop.f32.mrf.mxu0
        %v1237 = vadd.f32 0.0, %v1236
        %v1238 = vpop.f32.mrf.mxu0
        %v1239 = vadd.f32 0.0, %v1238
        %v1240 = vpop.f32.mrf.mxu0
        %v1241 = vadd.f32 0.0, %v1240
        %v1242 = vpop.f32.mrf.mxu0
        %v1243 = vadd.f32 0.0, %v1242
        %1244 = vmatprep.mubr.bf16.mxu0 %v544
        %1245 = vmatmul.mubr.bf16.gmra.mxu0 %v543
        %v1246 = vpop.f32.mrf.mxu0
        %v1247 = vadd.f32 0.0, %v1246
        %v1248 = vpop.f32.mrf.mxu0
        %v1249 = vadd.f32 0.0, %v1248
        %v1250 = vpop.f32.mrf.mxu0
        %v1251 = vadd.f32 0.0, %v1250
        %v1252 = vpop.f32.mrf.mxu0
        %v1253 = vadd.f32 0.0, %v1252
        %1254 = vmatprep.mubr.bf16.mxu0 %v547
        %1255 = vmatmul.mubr.bf16.gmra.mxu0 %v546
        %v1256 = vpop.f32.mrf.mxu0
        %v1257 = vadd.f32 0.0, %v1256
        %v1258 = vpop.f32.mrf.mxu0
        %v1259 = vadd.f32 0.0, %v1258
        %v1260 = vpop.f32.mrf.mxu0
        %v1261 = vadd.f32 0.0, %v1260
        %v1262 = vpop.f32.mrf.mxu0
        %v1263 = vadd.f32 0.0, %v1262
        %1264 = vmatprep.mubr.bf16.mxu0 %v550
        %1265 = vmatmul.mubr.bf16.gmra.mxu0 %v549
        %v1266 = vpop.f32.mrf.mxu0
        %v1267 = vadd.f32 0.0, %v1266
        %v1268 = vpop.f32.mrf.mxu0
        %v1269 = vadd.f32 0.0, %v1268
        %v1270 = vpop.f32.mrf.mxu0
        %v1271 = vadd.f32 0.0, %v1270
        %v1272 = vpop.f32.mrf.mxu0
        %v1273 = vadd.f32 0.0, %v1272
        %1274 = vmatprep.mubr.bf16.mxu0 %v553
        %1275 = vmatmul.mubr.bf16.gmra.mxu0 %v552
        %v1276 = vpop.f32.mrf.mxu0
        %v1277 = vadd.f32 0.0, %v1276
        %v1278 = vpop.f32.mrf.mxu0
        %v1279 = vadd.f32 0.0, %v1278
        %v1280 = vpop.f32.mrf.mxu0
        %v1281 = vadd.f32 0.0, %v1280
        %v1282 = vpop.f32.mrf.mxu0
        %v1283 = vadd.f32 0.0, %v1282
        %1284 = vmatprep.mubr.bf16.mxu0 %v556
        %1285 = vmatmul.mubr.bf16.gmra.mxu0 %v555
        %v1286 = vpop.f32.mrf.mxu0
        %v1287 = vadd.f32 0.0, %v1286
        %v1288 = vpop.f32.mrf.mxu0
        %v1289 = vadd.f32 0.0, %v1288
        %v1290 = vpop.f32.mrf.mxu0
        %v1291 = vadd.f32 0.0, %v1290
        %v1292 = vpop.f32.mrf.mxu0
        %v1293 = vadd.f32 0.0, %v1292
        %1294 = vdwg.mxu0
        %1295 = vmatprep.subr.bf16.mxu0 %v1028
        %1296 = vmatpush1.bf16.msra.mxu0 %v1027
        %1297 = vmatprep.subr.bf16.mxu0 %v1025
        %1298 = vmatpush1.bf16.msra.mxu0 %v1024
        %1299 = vmatprep.subr.bf16.mxu0 %v1022
        %1300 = vmatpush1.bf16.msra.mxu0 %v1021
        %1301 = vmatprep.subr.bf16.mxu0 %v1019
        %1302 = vmatpush1.bf16.msra.mxu0 %v1018
        %1303 = vmatprep.subr.bf16.mxu0 %v1016
        %1304 = vmatpush1.bf16.msra.mxu0 %v1015
        %1305 = vmatprep.subr.bf16.mxu0 %v1013
        %1306 = vmatpush1.bf16.msra.mxu0 %v1012
        %1307 = vmatprep.subr.bf16.mxu0 %v1010
        %1308 = vmatpush1.bf16.msra.mxu0 %v1009
        %1309 = vmatprep.subr.bf16.mxu0 %v1007
        %1310 = vmatpush1.bf16.msra.mxu0 %v1006
        %1311 = vmatprep.subr.bf16.mxu0 0
        %1312 = vmatpush2.bf16.msra.mxu0 0
        %1313 = vmatprep.subr.bf16.mxu0 0
        %1314 = vmatpush2.bf16.msra.mxu0 0
        %1315 = vmatprep.subr.bf16.mxu0 0
        %1316 = vmatpush2.bf16.msra.mxu0 0
        %1317 = vmatprep.subr.bf16.mxu0 0
        %1318 = vmatpush2.bf16.msra.mxu0 0
        %1319 = vmatprep.subr.bf16.mxu0 0
        %1320 = vmatpush2.bf16.msra.mxu0 0
        %1321 = vmatprep.subr.bf16.mxu0 0
        %1322 = vmatpush2.bf16.msra.mxu0 0
        %1323 = vmatprep.subr.bf16.mxu0 0
        %1324 = vmatpush2.bf16.msra.mxu0 0
        %1325 = vmatprep.subr.bf16.mxu0 0
        %1326 = vmatpush2.bf16.msra.mxu0 0
        %1327 = vmatprep.mubr.bf16.mxu0 0
        %1328 = vmatmul.mubr.bf16.gmra.mxu0 %v512
        %v1329 = vpop.f32.mrf.mxu0
        %v1330 = vadd.f32 %v1137, %v1329
        %v1331 = vpop.f32.mrf.mxu0
        %v1332 = vadd.f32 %v1139, %v1331
        %v1333 = vpop.f32.mrf.mxu0
        %v1334 = vadd.f32 %v1141, %v1333
        %v1335 = vpop.f32.mrf.mxu0
        %v1336 = vadd.f32 %v1143, %v1335
        %1337 = vmatprep.mubr.bf16.mxu0 0
        %1338 = vmatmul.mubr.bf16.gmra.mxu0 %v515
        %v1339 = vpop.f32.mrf.mxu0
        %v1340 = vadd.f32 %v1147, %v1339
        %v1341 = vpop.f32.mrf.mxu0
        %v1342 = vadd.f32 %v1149, %v1341
        %v1343 = vpop.f32.mrf.mxu0
        %v1344 = vadd.f32 %v1151, %v1343
        %v1345 = vpop.f32.mrf.mxu0
        %v1346 = vadd.f32 %v1153, %v1345
        %1347 = vmatprep.mubr.bf16.mxu0 0
        %1348 = vmatmul.mubr.bf16.gmra.mxu0 %v518
        %v1349 = vpop.f32.mrf.mxu0
        %v1350 = vadd.f32 %v1157, %v1349
        %v1351 = vpop.f32.mrf.mxu0
        %v1352 = vadd.f32 %v1159, %v1351
        %v1353 = vpop.f32.mrf.mxu0
        %v1354 = vadd.f32 %v1161, %v1353
        %v1355 = vpop.f32.mrf.mxu0
        %v1356 = vadd.f32 %v1163, %v1355
        %1357 = vmatprep.mubr.bf16.mxu0 0
        %1358 = vmatmul.mubr.bf16.gmra.mxu0 %v521
        %v1359 = vpop.f32.mrf.mxu0
        %v1360 = vadd.f32 %v1167, %v1359
        %v1361 = vpop.f32.mrf.mxu0
        %v1362 = vadd.f32 %v1169, %v1361
        %v1363 = vpop.f32.mrf.mxu0
        %v1364 = vadd.f32 %v1171, %v1363
        %v1365 = vpop.f32.mrf.mxu0
        %v1366 = vadd.f32 %v1173, %v1365
        %1367 = vmatprep.mubr.bf16.mxu0 0
        %1368 = vmatmul.mubr.bf16.gmra.mxu0 %v524
        %v1369 = vpop.f32.mrf.mxu0
        %v1370 = vadd.f32 %v1177, %v1369
        %v1371 = vpop.f32.mrf.mxu0
        %v1372 = vadd.f32 %v1179, %v1371
        %v1373 = vpop.f32.mrf.mxu0
        %v1374 = vadd.f32 %v1181, %v1373
        %v1375 = vpop.f32.mrf.mxu0
        %v1376 = vadd.f32 %v1183, %v1375
        %1377 = vmatprep.mubr.bf16.mxu0 0
        %1378 = vmatmul.mubr.bf16.gmra.mxu0 %v527
        %v1379 = vpop.f32.mrf.mxu0
        %v1380 = vadd.f32 %v1187, %v1379
        %v1381 = vpop.f32.mrf.mxu0
        %v1382 = vadd.f32 %v1189, %v1381
        %v1383 = vpop.f32.mrf.mxu0
        %v1384 = vadd.f32 %v1191, %v1383
        %v1385 = vpop.f32.mrf.mxu0
        %v1386 = vadd.f32 %v1193, %v1385
        %1387 = vmatprep.mubr.bf16.mxu0 0
        %1388 = vmatmul.mubr.bf16.gmra.mxu0 %v530
        %v1389 = vpop.f32.mrf.mxu0
        %v1390 = vadd.f32 %v1197, %v1389
        %v1391 = vpop.f32.mrf.mxu0
        %v1392 = vadd.f32 %v1199, %v1391
        %v1393 = vpop.f32.mrf.mxu0
        %v1394 = vadd.f32 %v1201, %v1393
        %v1395 = vpop.f32.mrf.mxu0
        %v1396 = vadd.f32 %v1203, %v1395
        %1397 = vmatprep.mubr.bf16.mxu0 0
        %1398 = vmatmul.mubr.bf16.gmra.mxu0 %v533
        %v1399 = vpop.f32.mrf.mxu0
        %v1400 = vadd.f32 %v1207, %v1399
        %v1401 = vpop.f32.mrf.mxu0
        %v1402 = vadd.f32 %v1209, %v1401
        %v1403 = vpop.f32.mrf.mxu0
        %v1404 = vadd.f32 %v1211, %v1403
        %v1405 = vpop.f32.mrf.mxu0
        %v1406 = vadd.f32 %v1213, %v1405
        %1407 = vmatprep.mubr.bf16.mxu0 0
        %1408 = vmatmul.mubr.bf16.gmra.mxu0 %v536
        %v1409 = vpop.f32.mrf.mxu0
        %v1410 = vadd.f32 %v1217, %v1409
        %v1411 = vpop.f32.mrf.mxu0
        %v1412 = vadd.f32 %v1219, %v1411
        %v1413 = vpop.f32.mrf.mxu0
        %v1414 = vadd.f32 %v1221, %v1413
        %v1415 = vpop.f32.mrf.mxu0
        %v1416 = vadd.f32 %v1223, %v1415
        %1417 = vmatprep.mubr.bf16.mxu0 0
        %1418 = vmatmul.mubr.bf16.gmra.mxu0 %v539
        %v1419 = vpop.f32.mrf.mxu0
        %v1420 = vadd.f32 %v1227, %v1419
        %v1421 = vpop.f32.mrf.mxu0
        %v1422 = vadd.f32 %v1229, %v1421
        %v1423 = vpop.f32.mrf.mxu0
        %v1424 = vadd.f32 %v1231, %v1423
        %v1425 = vpop.f32.mrf.mxu0
        %v1426 = vadd.f32 %v1233, %v1425
        %1427 = vmatprep.mubr.bf16.mxu0 0
        %1428 = vmatmul.mubr.bf16.gmra.mxu0 %v542
        %v1429 = vpop.f32.mrf.mxu0
        %v1430 = vadd.f32 %v1237, %v1429
        %v1431 = vpop.f32.mrf.mxu0
        %v1432 = vadd.f32 %v1239, %v1431
        %v1433 = vpop.f32.mrf.mxu0
        %v1434 = vadd.f32 %v1241, %v1433
        %v1435 = vpop.f32.mrf.mxu0
        %v1436 = vadd.f32 %v1243, %v1435
        %1437 = vmatprep.mubr.bf16.mxu0 0
        %1438 = vmatmul.mubr.bf16.gmra.mxu0 %v545
        %v1439 = vpop.f32.mrf.mxu0
        %v1440 = vadd.f32 %v1247, %v1439
        %v1441 = vpop.f32.mrf.mxu0
        %v1442 = vadd.f32 %v1249, %v1441
        %v1443 = vpop.f32.mrf.mxu0
        %v1444 = vadd.f32 %v1251, %v1443
        %v1445 = vpop.f32.mrf.mxu0
        %v1446 = vadd.f32 %v1253, %v1445
        %1447 = vmatprep.mubr.bf16.mxu0 0
        %1448 = vmatmul.mubr.bf16.gmra.mxu0 %v548
        %v1449 = vpop.f32.mrf.mxu0
        %v1450 = vadd.f32 %v1257, %v1449
        %v1451 = vpop.f32.mrf.mxu0
        %v1452 = vadd.f32 %v1259, %v1451
        %v1453 = vpop.f32.mrf.mxu0
        %v1454 = vadd.f32 %v1261, %v1453
        %v1455 = vpop.f32.mrf.mxu0
        %v1456 = vadd.f32 %v1263, %v1455
        %1457 = vmatprep.mubr.bf16.mxu0 0
        %1458 = vmatmul.mubr.bf16.gmra.mxu0 %v551
        %v1459 = vpop.f32.mrf.mxu0
        %v1460 = vadd.f32 %v1267, %v1459
        %v1461 = vpop.f32.mrf.mxu0
        %v1462 = vadd.f32 %v1269, %v1461
        %v1463 = vpop.f32.mrf.mxu0
        %v1464 = vadd.f32 %v1271, %v1463
        %v1465 = vpop.f32.mrf.mxu0
        %v1466 = vadd.f32 %v1273, %v1465
        %1467 = vmatprep.mubr.bf16.mxu0 0
        %1468 = vmatmul.mubr.bf16.gmra.mxu0 %v554
        %v1469 = vpop.f32.mrf.mxu0
        %v1470 = vadd.f32 %v1277, %v1469
        %v1471 = vpop.f32.mrf.mxu0
        %v1472 = vadd.f32 %v1279, %v1471
        %v1473 = vpop.f32.mrf.mxu0
        %v1474 = vadd.f32 %v1281, %v1473
        %v1475 = vpop.f32.mrf.mxu0
        %v1476 = vadd.f32 %v1283, %v1475
        %1477 = vmatprep.mubr.bf16.mxu0 0
        %1478 = vmatmul.mubr.bf16.gmra.mxu0 %v557
        %v1479 = vpop.f32.mrf.mxu0
        %v1480 = vadd.f32 %v1287, %v1479
        %v1481 = vpop.f32.mrf.mxu0
        %v1482 = vadd.f32 %v1289, %v1481
        %v1483 = vpop.f32.mrf.mxu0
        %v1484 = vadd.f32 %v1291, %v1483
        %v1485 = vpop.f32.mrf.mxu0
        %v1486 = vadd.f32 %v1293, %v1485
        %1487 = vdwg.mxu0
        %1488 = vmatprep.subr.bf16.mxu0 0
        %1489 = vmatpush1.bf16.msra.mxu0 %v981
        %1490 = vmatprep.subr.bf16.mxu0 0
        %1491 = vmatpush1.bf16.msra.mxu0 %v978
        %1492 = vmatprep.subr.bf16.mxu0 0
        %1493 = vmatpush1.bf16.msra.mxu0 %v975
        %1494 = vmatprep.subr.bf16.mxu0 0
        %1495 = vmatpush1.bf16.msra.mxu0 %v972
        %1496 = vmatprep.subr.bf16.mxu0 0
        %1497 = vmatpush1.bf16.msra.mxu0 %v969
        %1498 = vmatprep.subr.bf16.mxu0 0
        %1499 = vmatpush1.bf16.msra.mxu0 %v966
        %1500 = vmatprep.subr.bf16.mxu0 0
        %1501 = vmatpush1.bf16.msra.mxu0 %v963
        %1502 = vmatprep.subr.bf16.mxu0 0
        %1503 = vmatpush1.bf16.msra.mxu0 %v960
        %1504 = vmatprep.subr.bf16.mxu0 0
        %1505 = vmatpush2.bf16.msra.mxu0 %v1005
        %1506 = vmatprep.subr.bf16.mxu0 0
        %1507 = vmatpush2.bf16.msra.mxu0 %v1002
        %1508 = vmatprep.subr.bf16.mxu0 0
        %1509 = vmatpush2.bf16.msra.mxu0 %v999
        %1510 = vmatprep.subr.bf16.mxu0 0
        %1511 = vmatpush2.bf16.msra.mxu0 %v996
        %1512 = vmatprep.subr.bf16.mxu0 0
        %1513 = vmatpush2.bf16.msra.mxu0 %v993
        %1514 = vmatprep.subr.bf16.mxu0 0
        %1515 = vmatpush2.bf16.msra.mxu0 %v990
        %1516 = vmatprep.subr.bf16.mxu0 0
        %1517 = vmatpush2.bf16.msra.mxu0 %v987
        %1518 = vmatprep.subr.bf16.mxu0 0
        %1519 = vmatpush2.bf16.msra.mxu0 %v984
        %1520 = vmatprep.mubr.bf16.mxu0 %v511
        %1521 = vmatmul.mubr.bf16.gmra.mxu0 %v510
        %v1522 = vpop.f32.mrf.mxu0
        %v1523 = vadd.f32 0.0, %v1522
        %v1524 = vpop.f32.mrf.mxu0
        %v1525 = vpop.f32.mrf.mxu0
        %v1526 = vadd.f32 0.0, %v1525
        %v1527 = vpop.f32.mrf.mxu0
        %1528 = vmatprep.mubr.bf16.mxu0 %v514
        %1529 = vmatmul.mubr.bf16.gmra.mxu0 %v513
        %v1530 = vpop.f32.mrf.mxu0
        %v1531 = vadd.f32 0.0, %v1530
        %v1532 = vpop.f32.mrf.mxu0
        %v1533 = vpop.f32.mrf.mxu0
        %v1534 = vadd.f32 0.0, %v1533
        %v1535 = vpop.f32.mrf.mxu0
        %1536 = vmatprep.mubr.bf16.mxu0 %v517
        %1537 = vmatmul.mubr.bf16.gmra.mxu0 %v516
        %v1538 = vpop.f32.mrf.mxu0
        %v1539 = vadd.f32 0.0, %v1538
        %v1540 = vpop.f32.mrf.mxu0
        %v1541 = vpop.f32.mrf.mxu0
        %v1542 = vadd.f32 0.0, %v1541
        %v1543 = vpop.f32.mrf.mxu0
        %1544 = vmatprep.mubr.bf16.mxu0 %v520
        %1545 = vmatmul.mubr.bf16.gmra.mxu0 %v519
        %v1546 = vpop.f32.mrf.mxu0
        %v1547 = vadd.f32 0.0, %v1546
        %v1548 = vpop.f32.mrf.mxu0
        %v1549 = vpop.f32.mrf.mxu0
        %v1550 = vadd.f32 0.0, %v1549
        %v1551 = vpop.f32.mrf.mxu0
        %1552 = vmatprep.mubr.bf16.mxu0 %v523
        %1553 = vmatmul.mubr.bf16.gmra.mxu0 %v522
        %v1554 = vpop.f32.mrf.mxu0
        %v1555 = vadd.f32 0.0, %v1554
        %v1556 = vpop.f32.mrf.mxu0
        %v1557 = vpop.f32.mrf.mxu0
        %v1558 = vadd.f32 0.0, %v1557
        %v1559 = vpop.f32.mrf.mxu0
        %1560 = vmatprep.mubr.bf16.mxu0 %v526
        %1561 = vmatmul.mubr.bf16.gmra.mxu0 %v525
        %v1562 = vpop.f32.mrf.mxu0
        %v1563 = vadd.f32 0.0, %v1562
        %v1564 = vpop.f32.mrf.mxu0
        %v1565 = vpop.f32.mrf.mxu0
        %v1566 = vadd.f32 0.0, %v1565
        %v1567 = vpop.f32.mrf.mxu0
        %1568 = vmatprep.mubr.bf16.mxu0 %v529
        %1569 = vmatmul.mubr.bf16.gmra.mxu0 %v528
        %v1570 = vpop.f32.mrf.mxu0
        %v1571 = vadd.f32 0.0, %v1570
        %v1572 = vpop.f32.mrf.mxu0
        %v1573 = vpop.f32.mrf.mxu0
        %v1574 = vadd.f32 0.0, %v1573
        %v1575 = vpop.f32.mrf.mxu0
        %1576 = vmatprep.mubr.bf16.mxu0 %v532
        %1577 = vmatmul.mubr.bf16.gmra.mxu0 %v531
        %v1578 = vpop.f32.mrf.mxu0
        %v1579 = vadd.f32 0.0, %v1578
        %v1580 = vpop.f32.mrf.mxu0
        %v1581 = vpop.f32.mrf.mxu0
        %v1582 = vadd.f32 0.0, %v1581
        %v1583 = vpop.f32.mrf.mxu0
        %1584 = vmatprep.mubr.bf16.mxu0 %v535
        %1585 = vmatmul.mubr.bf16.gmra.mxu0 %v534
        %v1586 = vpop.f32.mrf.mxu0
        %v1587 = vadd.f32 0.0, %v1586
        %v1588 = vpop.f32.mrf.mxu0
        %v1589 = vpop.f32.mrf.mxu0
        %v1590 = vadd.f32 0.0, %v1589
        %v1591 = vpop.f32.mrf.mxu0
        %1592 = vmatprep.mubr.bf16.mxu0 %v538
        %1593 = vmatmul.mubr.bf16.gmra.mxu0 %v537
        %v1594 = vpop.f32.mrf.mxu0
        %v1595 = vadd.f32 0.0, %v1594
        %v1596 = vpop.f32.mrf.mxu0
        %v1597 = vpop.f32.mrf.mxu0
        %v1598 = vadd.f32 0.0, %v1597
        %v1599 = vpop.f32.mrf.mxu0
        %1600 = vmatprep.mubr.bf16.mxu0 %v541
        %1601 = vmatmul.mubr.bf16.gmra.mxu0 %v540
        %v1602 = vpop.f32.mrf.mxu0
        %v1603 = vadd.f32 0.0, %v1602
        %v1604 = vpop.f32.mrf.mxu0
        %v1605 = vpop.f32.mrf.mxu0
        %v1606 = vadd.f32 0.0, %v1605
        %v1607 = vpop.f32.mrf.mxu0
        %1608 = vmatprep.mubr.bf16.mxu0 %v544
        %1609 = vmatmul.mubr.bf16.gmra.mxu0 %v543
        %v1610 = vpop.f32.mrf.mxu0
        %v1611 = vadd.f32 0.0, %v1610
        %v1612 = vpop.f32.mrf.mxu0
        %v1613 = vpop.f32.mrf.mxu0
        %v1614 = vadd.f32 0.0, %v1613
        %v1615 = vpop.f32.mrf.mxu0
        %1616 = vmatprep.mubr.bf16.mxu0 %v547
        %1617 = vmatmul.mubr.bf16.gmra.mxu0 %v546
        %v1618 = vpop.f32.mrf.mxu0
        %v1619 = vadd.f32 0.0, %v1618
        %v1620 = vpop.f32.mrf.mxu0
        %v1621 = vpop.f32.mrf.mxu0
        %v1622 = vadd.f32 0.0, %v1621
        %v1623 = vpop.f32.mrf.mxu0
        %1624 = vmatprep.mubr.bf16.mxu0 %v550
        %1625 = vmatmul.mubr.bf16.gmra.mxu0 %v549
        %v1626 = vpop.f32.mrf.mxu0
        %v1627 = vadd.f32 0.0, %v1626
        %v1628 = vpop.f32.mrf.mxu0
        %v1629 = vpop.f32.mrf.mxu0
        %v1630 = vadd.f32 0.0, %v1629
        %v1631 = vpop.f32.mrf.mxu0
        %1632 = vmatprep.mubr.bf16.mxu0 %v553
        %1633 = vmatmul.mubr.bf16.gmra.mxu0 %v552
        %v1634 = vpop.f32.mrf.mxu0
        %v1635 = vadd.f32 0.0, %v1634
        %v1636 = vpop.f32.mrf.mxu0
        %v1637 = vpop.f32.mrf.mxu0
        %v1638 = vadd.f32 0.0, %v1637
        %v1639 = vpop.f32.mrf.mxu0
        %1640 = vmatprep.mubr.bf16.mxu0 %v556
        %1641 = vmatmul.mubr.bf16.gmra.mxu0 %v555
        %v1642 = vpop.f32.mrf.mxu0
        %v1643 = vadd.f32 0.0, %v1642
        %v1644 = vpop.f32.mrf.mxu0
        %v1645 = vpop.f32.mrf.mxu0
        %v1646 = vadd.f32 0.0, %v1645
        %v1647 = vpop.f32.mrf.mxu0
        %1648 = vdwg.mxu0
        %1649 = vmatprep.subr.bf16.mxu0 0
        %1650 = vmatpush1.bf16.msra.mxu0 %v1029
        %1651 = vmatprep.subr.bf16.mxu0 0
        %1652 = vmatpush1.bf16.msra.mxu0 %v1026
        %1653 = vmatprep.subr.bf16.mxu0 0
        %1654 = vmatpush1.bf16.msra.mxu0 %v1023
        %1655 = vmatprep.subr.bf16.mxu0 0
        %1656 = vmatpush1.bf16.msra.mxu0 %v1020
        %1657 = vmatprep.subr.bf16.mxu0 0
        %1658 = vmatpush1.bf16.msra.mxu0 %v1017
        %1659 = vmatprep.subr.bf16.mxu0 0
        %1660 = vmatpush1.bf16.msra.mxu0 %v1014
        %1661 = vmatprep.subr.bf16.mxu0 0
        %1662 = vmatpush1.bf16.msra.mxu0 %v1011
        %1663 = vmatprep.subr.bf16.mxu0 0
        %1664 = vmatpush1.bf16.msra.mxu0 %v1008
        %1665 = vmatprep.subr.bf16.mxu0 0
        %1666 = vmatpush2.bf16.msra.mxu0 0
        %1667 = vmatprep.subr.bf16.mxu0 0
        %1668 = vmatpush2.bf16.msra.mxu0 0
        %1669 = vmatprep.subr.bf16.mxu0 0
        %1670 = vmatpush2.bf16.msra.mxu0 0
        %1671 = vmatprep.subr.bf16.mxu0 0
        %1672 = vmatpush2.bf16.msra.mxu0 0
        %1673 = vmatprep.subr.bf16.mxu0 0
        %1674 = vmatpush2.bf16.msra.mxu0 0
        %1675 = vmatprep.subr.bf16.mxu0 0
        %1676 = vmatpush2.bf16.msra.mxu0 0
        %1677 = vmatprep.subr.bf16.mxu0 0
        %1678 = vmatpush2.bf16.msra.mxu0 0
        %1679 = vmatprep.subr.bf16.mxu0 0
        %1680 = vmatpush2.bf16.msra.mxu0 0
        %1681 = vmatprep.mubr.bf16.mxu0 0
        %1682 = vmatmul.mubr.bf16.gmra.mxu0 %v512
        %v1683 = vpop.f32.mrf.mxu0
        %v1684 = vadd.f32 %v1523, %v1683
        %v1685 = vpop.f32.mrf.mxu0
        %v1686 = vpop.f32.mrf.mxu0
        %v1687 = vadd.f32 %v1526, %v1686
        %v1688 = vpop.f32.mrf.mxu0
        %1689 = vmatprep.mubr.bf16.mxu0 0
        %1690 = vmatmul.mubr.bf16.gmra.mxu0 %v515
        %v1691 = vpop.f32.mrf.mxu0
        %v1692 = vadd.f32 %v1531, %v1691
        %v1693 = vpop.f32.mrf.mxu0
        %v1694 = vpop.f32.mrf.mxu0
        %v1695 = vadd.f32 %v1534, %v1694
        %v1696 = vpop.f32.mrf.mxu0
        %1697 = vmatprep.mubr.bf16.mxu0 0
        %1698 = vmatmul.mubr.bf16.gmra.mxu0 %v518
        %v1699 = vpop.f32.mrf.mxu0
        %v1700 = vadd.f32 %v1539, %v1699
        %v1701 = vpop.f32.mrf.mxu0
        %v1702 = vpop.f32.mrf.mxu0
        %v1703 = vadd.f32 %v1542, %v1702
        %v1704 = vpop.f32.mrf.mxu0
        %1705 = vmatprep.mubr.bf16.mxu0 0
        %1706 = vmatmul.mubr.bf16.gmra.mxu0 %v521
        %v1707 = vpop.f32.mrf.mxu0
        %v1708 = vadd.f32 %v1547, %v1707
        %v1709 = vpop.f32.mrf.mxu0
        %v1710 = vpop.f32.mrf.mxu0
        %v1711 = vadd.f32 %v1550, %v1710
        %v1712 = vpop.f32.mrf.mxu0
        %1713 = vmatprep.mubr.bf16.mxu0 0
        %1714 = vmatmul.mubr.bf16.gmra.mxu0 %v524
        %v1715 = vpop.f32.mrf.mxu0
        %v1716 = vadd.f32 %v1555, %v1715
        %v1717 = vpop.f32.mrf.mxu0
        %v1718 = vpop.f32.mrf.mxu0
        %v1719 = vadd.f32 %v1558, %v1718
        %v1720 = vpop.f32.mrf.mxu0
        %1721 = vmatprep.mubr.bf16.mxu0 0
        %1722 = vmatmul.mubr.bf16.gmra.mxu0 %v527
        %v1723 = vpop.f32.mrf.mxu0
        %v1724 = vadd.f32 %v1563, %v1723
        %v1725 = vpop.f32.mrf.mxu0
        %v1726 = vpop.f32.mrf.mxu0
        %v1727 = vadd.f32 %v1566, %v1726
        %v1728 = vpop.f32.mrf.mxu0
        %1729 = vmatprep.mubr.bf16.mxu0 0
        %1730 = vmatmul.mubr.bf16.gmra.mxu0 %v530
        %v1731 = vpop.f32.mrf.mxu0
        %v1732 = vadd.f32 %v1571, %v1731
        %v1733 = vpop.f32.mrf.mxu0
        %v1734 = vpop.f32.mrf.mxu0
        %v1735 = vadd.f32 %v1574, %v1734
        %v1736 = vpop.f32.mrf.mxu0
        %1737 = vmatprep.mubr.bf16.mxu0 0
        %1738 = vmatmul.mubr.bf16.gmra.mxu0 %v533
        %v1739 = vpop.f32.mrf.mxu0
        %v1740 = vadd.f32 %v1579, %v1739
        %v1741 = vpop.f32.mrf.mxu0
        %v1742 = vpop.f32.mrf.mxu0
        %v1743 = vadd.f32 %v1582, %v1742
        %v1744 = vpop.f32.mrf.mxu0
        %1745 = vmatprep.mubr.bf16.mxu0 0
        %1746 = vmatmul.mubr.bf16.gmra.mxu0 %v536
        %v1747 = vpop.f32.mrf.mxu0
        %v1748 = vadd.f32 %v1587, %v1747
        %v1749 = vpop.f32.mrf.mxu0
        %v1750 = vpop.f32.mrf.mxu0
        %v1751 = vadd.f32 %v1590, %v1750
        %v1752 = vpop.f32.mrf.mxu0
        %1753 = vmatprep.mubr.bf16.mxu0 0
        %1754 = vmatmul.mubr.bf16.gmra.mxu0 %v539
        %v1755 = vpop.f32.mrf.mxu0
        %v1756 = vadd.f32 %v1595, %v1755
        %v1757 = vpop.f32.mrf.mxu0
        %v1758 = vpop.f32.mrf.mxu0
        %v1759 = vadd.f32 %v1598, %v1758
        %v1760 = vpop.f32.mrf.mxu0
        %1761 = vmatprep.mubr.bf16.mxu0 0
        %1762 = vmatmul.mubr.bf16.gmra.mxu0 %v542
        %v1763 = vpop.f32.mrf.mxu0
        %v1764 = vadd.f32 %v1603, %v1763
        %v1765 = vpop.f32.mrf.mxu0
        %v1766 = vpop.f32.mrf.mxu0
        %v1767 = vadd.f32 %v1606, %v1766
        %v1768 = vpop.f32.mrf.mxu0
        %1769 = vmatprep.mubr.bf16.mxu0 0
        %1770 = vmatmul.mubr.bf16.gmra.mxu0 %v545
        %v1771 = vpop.f32.mrf.mxu0
        %v1772 = vadd.f32 %v1611, %v1771
        %v1773 = vpop.f32.mrf.mxu0
        %v1774 = vpop.f32.mrf.mxu0
        %v1775 = vadd.f32 %v1614, %v1774
        %v1776 = vpop.f32.mrf.mxu0
        %1777 = vmatprep.mubr.bf16.mxu0 0
        %1778 = vmatmul.mubr.bf16.gmra.mxu0 %v548
        %v1779 = vpop.f32.mrf.mxu0
        %v1780 = vadd.f32 %v1619, %v1779
        %v1781 = vpop.f32.mrf.mxu0
        %v1782 = vpop.f32.mrf.mxu0
        %v1783 = vadd.f32 %v1622, %v1782
        %v1784 = vpop.f32.mrf.mxu0
        %1785 = vmatprep.mubr.bf16.mxu0 0
        %1786 = vmatmul.mubr.bf16.gmra.mxu0 %v551
        %v1787 = vpop.f32.mrf.mxu0
        %v1788 = vadd.f32 %v1627, %v1787
        %v1789 = vpop.f32.mrf.mxu0
        %v1790 = vpop.f32.mrf.mxu0
        %v1791 = vadd.f32 %v1630, %v1790
        %v1792 = vpop.f32.mrf.mxu0
        %1793 = vmatprep.mubr.bf16.mxu0 0
        %1794 = vmatmul.mubr.bf16.gmra.mxu0 %v554
        %v1795 = vpop.f32.mrf.mxu0
        %v1796 = vadd.f32 %v1635, %v1795
        %v1797 = vpop.f32.mrf.mxu0
        %v1798 = vpop.f32.mrf.mxu0
        %v1799 = vadd.f32 %v1638, %v1798
        %v1800 = vpop.f32.mrf.mxu0
        %1801 = vmatprep.mubr.bf16.mxu0 0
        %1802 = vmatmul.mubr.bf16.gmra.mxu0 %v557
        %v1803 = vpop.f32.mrf.mxu0
        %v1804 = vadd.f32 %v1643, %v1803
        %v1805 = vpop.f32.mrf.mxu0
        %v1806 = vpop.f32.mrf.mxu0
        %v1807 = vadd.f32 %v1646, %v1806
        %v1808 = vpop.f32.mrf.mxu0
        %1809 = vdwg.mxu0
        %v1874 = vunpack.c.l.b16 %v558
        %v1875 = vunpack.c.h.b16 %v558
        %v1876 = vunpack.c.l.b16 %v559
        %v1877 = vunpack.c.l.b16 %v560
        %v1878 = vunpack.c.h.b16 %v560
        %v1879 = vunpack.c.l.b16 %v561
        %v1880 = vunpack.c.l.b16 %v562
        %v1881 = vunpack.c.h.b16 %v562
        %v1882 = vunpack.c.l.b16 %v563
        %v1883 = vunpack.c.l.b16 %v564
        %v1884 = vunpack.c.h.b16 %v564
        %v1885 = vunpack.c.l.b16 %v565
        %v1886 = vunpack.c.l.b16 %v566
        %v1887 = vunpack.c.h.b16 %v566
        %v1888 = vunpack.c.l.b16 %v567
        %v1889 = vunpack.c.l.b16 %v568
        %v1890 = vunpack.c.h.b16 %v568
        %v1891 = vunpack.c.l.b16 %v569
        %v1892 = vunpack.c.l.b16 %v570
        %v1893 = vunpack.c.h.b16 %v570
        %v1894 = vunpack.c.l.b16 %v571
        %v1895 = vunpack.c.l.b16 %v572
        %v1896 = vunpack.c.h.b16 %v572
        %v1897 = vunpack.c.l.b16 %v573
        %v1898 = vunpack.c.l.b16 %v574
        %v1899 = vunpack.c.h.b16 %v574
        %v1900 = vunpack.c.l.b16 %v575
        %v1901 = vunpack.c.l.b16 %v576
        %v1902 = vunpack.c.h.b16 %v576
        %v1903 = vunpack.c.l.b16 %v577
        %v1904 = vunpack.c.l.b16 %v578
        %v1905 = vunpack.c.h.b16 %v578
        %v1906 = vunpack.c.l.b16 %v579
        %v1907 = vunpack.c.l.b16 %v580
        %v1908 = vunpack.c.h.b16 %v580
        %v1909 = vunpack.c.l.b16 %v581
        %v1910 = vunpack.c.l.b16 %v582
        %v1911 = vunpack.c.h.b16 %v582
        %v1912 = vunpack.c.l.b16 %v583
        %v1913 = vunpack.c.l.b16 %v584
        %v1914 = vunpack.c.h.b16 %v584
        %v1915 = vunpack.c.l.b16 %v585
        %v1916 = vunpack.c.l.b16 %v586
        %v1917 = vunpack.c.h.b16 %v586
        %v1918 = vunpack.c.l.b16 %v587
        %v1919 = vunpack.c.l.b16 %v588
        %v1920 = vunpack.c.h.b16 %v588
        %v1921 = vunpack.c.l.b16 %v589
        %v1922 = vunpack.c.l.b16 %v590
        %v1923 = vunpack.c.h.b16 %v590
        %v1924 = vunpack.c.l.b16 %v591
        %v1925 = vunpack.c.l.b16 %v592
        %v1926 = vunpack.c.h.b16 %v592
        %v1927 = vunpack.c.l.b16 %v593
        %v1928 = vunpack.c.l.b16 %v594
        %v1929 = vunpack.c.h.b16 %v594
        %v1930 = vunpack.c.l.b16 %v595
        %v1931 = vunpack.c.l.b16 %v596
        %v1932 = vunpack.c.h.b16 %v596
        %v1933 = vunpack.c.l.b16 %v597
        %v1934 = vunpack.c.l.b16 %v598
        %v1935 = vunpack.c.h.b16 %v598
        %v1936 = vunpack.c.l.b16 %v599
        %v1937 = vunpack.c.l.b16 %v600
        %v1938 = vunpack.c.h.b16 %v600
        %v1939 = vunpack.c.l.b16 %v601
        %v1940 = vunpack.c.l.b16 %v602
        %v1941 = vunpack.c.h.b16 %v602
        %v1942 = vunpack.c.l.b16 %v603
        %v1943 = vunpack.c.l.b16 %v604
        %v1944 = vunpack.c.h.b16 %v604
        %v1945 = vunpack.c.l.b16 %v605
        %v1946 = vunpack.c.l.b16 %v606
        %v1947 = vunpack.c.h.b16 %v606
        %v1948 = vunpack.c.l.b16 %v607
        %v1949 = vunpack.c.l.b16 %v608
        %v1950 = vunpack.c.h.b16 %v608
        %v1951 = vunpack.c.l.b16 %v609
        %v1952 = vunpack.c.l.b16 %v610
        %v1953 = vunpack.c.h.b16 %v610
        %v1954 = vunpack.c.l.b16 %v611
        %v1955 = vunpack.c.l.b16 %v612
        %v1956 = vunpack.c.h.b16 %v612
        %v1957 = vunpack.c.l.b16 %v613
        %v1958 = vunpack.c.l.b16 %v614
        %v1959 = vunpack.c.h.b16 %v614
        %v1960 = vunpack.c.l.b16 %v615
        %v1961 = vunpack.c.l.b16 %v616
        %v1962 = vunpack.c.h.b16 %v616
        %v1963 = vunpack.c.l.b16 %v617
        %v1964 = vunpack.c.l.b16 %v618
        %v1965 = vunpack.c.h.b16 %v618
        %v1966 = vunpack.c.l.b16 %v619
        %v1967 = vunpack.c.l.b16 %v620
        %v1968 = vunpack.c.h.b16 %v620
        %v1969 = vunpack.c.l.b16 %v621
        %v1970 = vpack.c.b16 %v1877, %v1874
        %v1971 = vpack.c.b16 %v1878, %v1875
        %v1972 = vpack.c.b16 %v1879, %v1876
        %v1973 = vpack.c.b16 %v1883, %v1880
        %v1974 = vpack.c.b16 %v1884, %v1881
        %v1975 = vpack.c.b16 %v1885, %v1882
        %v1976 = vpack.c.b16 %v1889, %v1886
        %v1977 = vpack.c.b16 %v1890, %v1887
        %v1978 = vpack.c.b16 %v1891, %v1888
        %v1979 = vpack.c.b16 %v1895, %v1892
        %v1980 = vpack.c.b16 %v1896, %v1893
        %v1981 = vpack.c.b16 %v1897, %v1894
        %v1982 = vpack.c.b16 %v1901, %v1898
        %v1983 = vpack.c.b16 %v1902, %v1899
        %v1984 = vpack.c.b16 %v1903, %v1900
        %v1985 = vpack.c.b16 %v1907, %v1904
        %v1986 = vpack.c.b16 %v1908, %v1905
        %v1987 = vpack.c.b16 %v1909, %v1906
        %v1988 = vpack.c.b16 %v1913, %v1910
        %v1989 = vpack.c.b16 %v1914, %v1911
        %v1990 = vpack.c.b16 %v1915, %v1912
        %v1991 = vpack.c.b16 %v1919, %v1916
        %v1992 = vpack.c.b16 %v1920, %v1917
        %v1993 = vpack.c.b16 %v1921, %v1918
        %v1994 = vpack.c.b16 %v1925, %v1922
        %v1995 = vpack.c.b16 %v1926, %v1923
        %v1996 = vpack.c.b16 %v1927, %v1924
        %v1997 = vpack.c.b16 %v1931, %v1928
        %v1998 = vpack.c.b16 %v1932, %v1929
        %v1999 = vpack.c.b16 %v1933, %v1930
        %v2000 = vpack.c.b16 %v1937, %v1934
        %v2001 = vpack.c.b16 %v1938, %v1935
        %v2002 = vpack.c.b16 %v1939, %v1936
        %v2003 = vpack.c.b16 %v1943, %v1940
        %v2004 = vpack.c.b16 %v1944, %v1941
        %v2005 = vpack.c.b16 %v1945, %v1942
        %v2006 = vpack.c.b16 %v1949, %v1946
        %v2007 = vpack.c.b16 %v1950, %v1947
        %v2008 = vpack.c.b16 %v1951, %v1948
        %v2009 = vpack.c.b16 %v1955, %v1952
        %v2010 = vpack.c.b16 %v1956, %v1953
        %v2011 = vpack.c.b16 %v1957, %v1954
        %v2012 = vpack.c.b16 %v1961, %v1958
        %v2013 = vpack.c.b16 %v1962, %v1959
        %v2014 = vpack.c.b16 %v1963, %v1960
        %v2015 = vpack.c.b16 %v1967, %v1964
        %v2016 = vpack.c.b16 %v1968, %v1965
        %v2017 = vpack.c.b16 %v1969, %v1966
        %2066 = vmatprep.subr.bf16.mxu0 %v1992
        %2067 = vmatpush1.bf16.msra.mxu0 %v1991
        %2068 = vmatprep.subr.bf16.mxu0 %v1989
        %2069 = vmatpush1.bf16.msra.mxu0 %v1988
        %2070 = vmatprep.subr.bf16.mxu0 %v1986
        %2071 = vmatpush1.bf16.msra.mxu0 %v1985
        %2072 = vmatprep.subr.bf16.mxu0 %v1983
        %2073 = vmatpush1.bf16.msra.mxu0 %v1982
        %2074 = vmatprep.subr.bf16.mxu0 %v1980
        %2075 = vmatpush1.bf16.msra.mxu0 %v1979
        %2076 = vmatprep.subr.bf16.mxu0 %v1977
        %2077 = vmatpush1.bf16.msra.mxu0 %v1976
        %2078 = vmatprep.subr.bf16.mxu0 %v1974
        %2079 = vmatpush1.bf16.msra.mxu0 %v1973
        %2080 = vmatprep.subr.bf16.mxu0 %v1971
        %2081 = vmatpush1.bf16.msra.mxu0 %v1970
        %2082 = vmatprep.subr.bf16.mxu0 %v2016
        %2083 = vmatpush2.bf16.msra.mxu0 %v2015
        %2084 = vmatprep.subr.bf16.mxu0 %v2013
        %2085 = vmatpush2.bf16.msra.mxu0 %v2012
        %2086 = vmatprep.subr.bf16.mxu0 %v2010
        %2087 = vmatpush2.bf16.msra.mxu0 %v2009
        %2088 = vmatprep.subr.bf16.mxu0 %v2007
        %2089 = vmatpush2.bf16.msra.mxu0 %v2006
        %2090 = vmatprep.subr.bf16.mxu0 %v2004
        %2091 = vmatpush2.bf16.msra.mxu0 %v2003
        %2092 = vmatprep.subr.bf16.mxu0 %v2001
        %2093 = vmatpush2.bf16.msra.mxu0 %v2000
        %2094 = vmatprep.subr.bf16.mxu0 %v1998
        %2095 = vmatpush2.bf16.msra.mxu0 %v1997
        %2096 = vmatprep.subr.bf16.mxu0 %v1995
        %2097 = vmatpush2.bf16.msra.mxu0 %v1994
        %2098 = vmatprep.mubr.bf16.mxu0 %v383
        %2099 = vmatmul.mubr.bf16.gmra.mxu0 %v382
        %v2100 = vpop.f32.mrf.mxu0
        %v2101 = vadd.f32 %v1330, %v2100
        %v2102 = vpop.f32.mrf.mxu0
        %v2103 = vadd.f32 %v1332, %v2102
        %v2104 = vpop.f32.mrf.mxu0
        %v2105 = vadd.f32 %v1334, %v2104
        %v2106 = vpop.f32.mrf.mxu0
        %v2107 = vadd.f32 %v1336, %v2106
        %2108 = vmatprep.mubr.bf16.mxu0 %v385
        %2109 = vmatmul.mubr.bf16.gmra.mxu0 %v384
        %v2110 = vpop.f32.mrf.mxu0
        %v2111 = vadd.f32 %v1340, %v2110
        %v2112 = vpop.f32.mrf.mxu0
        %v2113 = vadd.f32 %v1342, %v2112
        %v2114 = vpop.f32.mrf.mxu0
        %v2115 = vadd.f32 %v1344, %v2114
        %v2116 = vpop.f32.mrf.mxu0
        %v2117 = vadd.f32 %v1346, %v2116
        %2118 = vmatprep.mubr.bf16.mxu0 %v387
        %2119 = vmatmul.mubr.bf16.gmra.mxu0 %v386
        %v2120 = vpop.f32.mrf.mxu0
        %v2121 = vadd.f32 %v1350, %v2120
        %v2122 = vpop.f32.mrf.mxu0
        %v2123 = vadd.f32 %v1352, %v2122
        %v2124 = vpop.f32.mrf.mxu0
        %v2125 = vadd.f32 %v1354, %v2124
        %v2126 = vpop.f32.mrf.mxu0
        %v2127 = vadd.f32 %v1356, %v2126
        %2128 = vmatprep.mubr.bf16.mxu0 %v389
        %2129 = vmatmul.mubr.bf16.gmra.mxu0 %v388
        %v2130 = vpop.f32.mrf.mxu0
        %v2131 = vadd.f32 %v1360, %v2130
        %v2132 = vpop.f32.mrf.mxu0
        %v2133 = vadd.f32 %v1362, %v2132
        %v2134 = vpop.f32.mrf.mxu0
        %v2135 = vadd.f32 %v1364, %v2134
        %v2136 = vpop.f32.mrf.mxu0
        %v2137 = vadd.f32 %v1366, %v2136
        %2138 = vmatprep.mubr.bf16.mxu0 %v391
        %2139 = vmatmul.mubr.bf16.gmra.mxu0 %v390
        %v2140 = vpop.f32.mrf.mxu0
        %v2141 = vadd.f32 %v1370, %v2140
        %v2142 = vpop.f32.mrf.mxu0
        %v2143 = vadd.f32 %v1372, %v2142
        %v2144 = vpop.f32.mrf.mxu0
        %v2145 = vadd.f32 %v1374, %v2144
        %v2146 = vpop.f32.mrf.mxu0
        %v2147 = vadd.f32 %v1376, %v2146
        %2148 = vmatprep.mubr.bf16.mxu0 %v393
        %2149 = vmatmul.mubr.bf16.gmra.mxu0 %v392
        %v2150 = vpop.f32.mrf.mxu0
        %v2151 = vadd.f32 %v1380, %v2150
        %v2152 = vpop.f32.mrf.mxu0
        %v2153 = vadd.f32 %v1382, %v2152
        %v2154 = vpop.f32.mrf.mxu0
        %v2155 = vadd.f32 %v1384, %v2154
        %v2156 = vpop.f32.mrf.mxu0
        %v2157 = vadd.f32 %v1386, %v2156
        %2158 = vmatprep.mubr.bf16.mxu0 %v395
        %2159 = vmatmul.mubr.bf16.gmra.mxu0 %v394
        %v2160 = vpop.f32.mrf.mxu0
        %v2161 = vadd.f32 %v1390, %v2160
        %v2162 = vpop.f32.mrf.mxu0
        %v2163 = vadd.f32 %v1392, %v2162
        %v2164 = vpop.f32.mrf.mxu0
        %v2165 = vadd.f32 %v1394, %v2164
        %v2166 = vpop.f32.mrf.mxu0
        %v2167 = vadd.f32 %v1396, %v2166
        %2168 = vmatprep.mubr.bf16.mxu0 %v397
        %2169 = vmatmul.mubr.bf16.gmra.mxu0 %v396
        %v2170 = vpop.f32.mrf.mxu0
        %v2171 = vadd.f32 %v1400, %v2170
        %v2172 = vpop.f32.mrf.mxu0
        %v2173 = vadd.f32 %v1402, %v2172
        %v2174 = vpop.f32.mrf.mxu0
        %v2175 = vadd.f32 %v1404, %v2174
        %v2176 = vpop.f32.mrf.mxu0
        %v2177 = vadd.f32 %v1406, %v2176
        %2178 = vmatprep.mubr.bf16.mxu0 %v399
        %2179 = vmatmul.mubr.bf16.gmra.mxu0 %v398
        %v2180 = vpop.f32.mrf.mxu0
        %v2181 = vadd.f32 %v1410, %v2180
        %v2182 = vpop.f32.mrf.mxu0
        %v2183 = vadd.f32 %v1412, %v2182
        %v2184 = vpop.f32.mrf.mxu0
        %v2185 = vadd.f32 %v1414, %v2184
        %v2186 = vpop.f32.mrf.mxu0
        %v2187 = vadd.f32 %v1416, %v2186
        %2188 = vmatprep.mubr.bf16.mxu0 %v401
        %2189 = vmatmul.mubr.bf16.gmra.mxu0 %v400
        %v2190 = vpop.f32.mrf.mxu0
        %v2191 = vadd.f32 %v1420, %v2190
        %v2192 = vpop.f32.mrf.mxu0
        %v2193 = vadd.f32 %v1422, %v2192
        %v2194 = vpop.f32.mrf.mxu0
        %v2195 = vadd.f32 %v1424, %v2194
        %v2196 = vpop.f32.mrf.mxu0
        %v2197 = vadd.f32 %v1426, %v2196
        %2198 = vmatprep.mubr.bf16.mxu0 %v403
        %2199 = vmatmul.mubr.bf16.gmra.mxu0 %v402
        %v2200 = vpop.f32.mrf.mxu0
        %v2201 = vadd.f32 %v1430, %v2200
        %v2202 = vpop.f32.mrf.mxu0
        %v2203 = vadd.f32 %v1432, %v2202
        %v2204 = vpop.f32.mrf.mxu0
        %v2205 = vadd.f32 %v1434, %v2204
        %v2206 = vpop.f32.mrf.mxu0
        %v2207 = vadd.f32 %v1436, %v2206
        %2208 = vmatprep.mubr.bf16.mxu0 %v405
        %2209 = vmatmul.mubr.bf16.gmra.mxu0 %v404
        %v2210 = vpop.f32.mrf.mxu0
        %v2211 = vadd.f32 %v1440, %v2210
        %v2212 = vpop.f32.mrf.mxu0
        %v2213 = vadd.f32 %v1442, %v2212
        %v2214 = vpop.f32.mrf.mxu0
        %v2215 = vadd.f32 %v1444, %v2214
        %v2216 = vpop.f32.mrf.mxu0
        %v2217 = vadd.f32 %v1446, %v2216
        %2218 = vmatprep.mubr.bf16.mxu0 %v407
        %2219 = vmatmul.mubr.bf16.gmra.mxu0 %v406
        %v2220 = vpop.f32.mrf.mxu0
        %v2221 = vadd.f32 %v1450, %v2220
        %v2222 = vpop.f32.mrf.mxu0
        %v2223 = vadd.f32 %v1452, %v2222
        %v2224 = vpop.f32.mrf.mxu0
        %v2225 = vadd.f32 %v1454, %v2224
        %v2226 = vpop.f32.mrf.mxu0
        %v2227 = vadd.f32 %v1456, %v2226
        %2228 = vmatprep.mubr.bf16.mxu0 %v409
        %2229 = vmatmul.mubr.bf16.gmra.mxu0 %v408
        %v2230 = vpop.f32.mrf.mxu0
        %v2231 = vadd.f32 %v1460, %v2230
        %v2232 = vpop.f32.mrf.mxu0
        %v2233 = vadd.f32 %v1462, %v2232
        %v2234 = vpop.f32.mrf.mxu0
        %v2235 = vadd.f32 %v1464, %v2234
        %v2236 = vpop.f32.mrf.mxu0
        %v2237 = vadd.f32 %v1466, %v2236
        %2238 = vmatprep.mubr.bf16.mxu0 %v411
        %2239 = vmatmul.mubr.bf16.gmra.mxu0 %v410
        %v2240 = vpop.f32.mrf.mxu0
        %v2241 = vadd.f32 %v1470, %v2240
        %v2242 = vpop.f32.mrf.mxu0
        %v2243 = vadd.f32 %v1472, %v2242
        %v2244 = vpop.f32.mrf.mxu0
        %v2245 = vadd.f32 %v1474, %v2244
        %v2246 = vpop.f32.mrf.mxu0
        %v2247 = vadd.f32 %v1476, %v2246
        %2248 = vmatprep.mubr.bf16.mxu0 %v413
        %2249 = vmatmul.mubr.bf16.gmra.mxu0 %v412
        %v2250 = vpop.f32.mrf.mxu0
        %v2251 = vadd.f32 %v1480, %v2250
        %v2252 = vpop.f32.mrf.mxu0
        %v2253 = vadd.f32 %v1482, %v2252
        %v2254 = vpop.f32.mrf.mxu0
        %v2255 = vadd.f32 %v1484, %v2254
        %v2256 = vpop.f32.mrf.mxu0
        %v2257 = vadd.f32 %v1486, %v2256
        %2258 = vdwg.mxu0
        %2259 = vmatprep.subr.bf16.mxu0 0
        %2260 = vmatpush1.bf16.msra.mxu0 %v1993
        %2261 = vmatprep.subr.bf16.mxu0 0
        %2262 = vmatpush1.bf16.msra.mxu0 %v1990
        %2263 = vmatprep.subr.bf16.mxu0 0
        %2264 = vmatpush1.bf16.msra.mxu0 %v1987
        %2265 = vmatprep.subr.bf16.mxu0 0
        %2266 = vmatpush1.bf16.msra.mxu0 %v1984
        %2267 = vmatprep.subr.bf16.mxu0 0
        %2268 = vmatpush1.bf16.msra.mxu0 %v1981
        %2269 = vmatprep.subr.bf16.mxu0 0
        %2270 = vmatpush1.bf16.msra.mxu0 %v1978
        %2271 = vmatprep.subr.bf16.mxu0 0
        %2272 = vmatpush1.bf16.msra.mxu0 %v1975
        %2273 = vmatprep.subr.bf16.mxu0 0
        %2274 = vmatpush1.bf16.msra.mxu0 %v1972
        %2275 = vmatprep.subr.bf16.mxu0 0
        %2276 = vmatpush2.bf16.msra.mxu0 %v2017
        %2277 = vmatprep.subr.bf16.mxu0 0
        %2278 = vmatpush2.bf16.msra.mxu0 %v2014
        %2279 = vmatprep.subr.bf16.mxu0 0
        %2280 = vmatpush2.bf16.msra.mxu0 %v2011
        %2281 = vmatprep.subr.bf16.mxu0 0
        %2282 = vmatpush2.bf16.msra.mxu0 %v2008
        %2283 = vmatprep.subr.bf16.mxu0 0
        %2284 = vmatpush2.bf16.msra.mxu0 %v2005
        %2285 = vmatprep.subr.bf16.mxu0 0
        %2286 = vmatpush2.bf16.msra.mxu0 %v2002
        %2287 = vmatprep.subr.bf16.mxu0 0
        %2288 = vmatpush2.bf16.msra.mxu0 %v1999
        %2289 = vmatprep.subr.bf16.mxu0 0
        %2290 = vmatpush2.bf16.msra.mxu0 %v1996
        %2291 = vmatprep.mubr.bf16.mxu0 %v383
        %2292 = vmatmul.mubr.bf16.gmra.mxu0 %v382
        %v2293 = vpop.f32.mrf.mxu0
        %v2294 = vadd.f32 %v1684, %v2293
        %v2295 = vpop.f32.mrf.mxu0
        %v2296 = vpop.f32.mrf.mxu0
        %v2297 = vadd.f32 %v1687, %v2296
        %v2298 = vpop.f32.mrf.mxu0
        %2299 = vmatprep.mubr.bf16.mxu0 %v385
        %2300 = vmatmul.mubr.bf16.gmra.mxu0 %v384
        %v2301 = vpop.f32.mrf.mxu0
        %v2302 = vadd.f32 %v1692, %v2301
        %v2303 = vpop.f32.mrf.mxu0
        %v2304 = vpop.f32.mrf.mxu0
        %v2305 = vadd.f32 %v1695, %v2304
        %v2306 = vpop.f32.mrf.mxu0
        %2307 = vmatprep.mubr.bf16.mxu0 %v387
        %2308 = vmatmul.mubr.bf16.gmra.mxu0 %v386
        %v2309 = vpop.f32.mrf.mxu0
        %v2310 = vadd.f32 %v1700, %v2309
        %v2311 = vpop.f32.mrf.mxu0
        %v2312 = vpop.f32.mrf.mxu0
        %v2313 = vadd.f32 %v1703, %v2312
        %v2314 = vpop.f32.mrf.mxu0
        %2315 = vmatprep.mubr.bf16.mxu0 %v389
        %2316 = vmatmul.mubr.bf16.gmra.mxu0 %v388
        %v2317 = vpop.f32.mrf.mxu0
        %v2318 = vadd.f32 %v1708, %v2317
        %v2319 = vpop.f32.mrf.mxu0
        %v2320 = vpop.f32.mrf.mxu0
        %v2321 = vadd.f32 %v1711, %v2320
        %v2322 = vpop.f32.mrf.mxu0
        %2323 = vmatprep.mubr.bf16.mxu0 %v391
        %2324 = vmatmul.mubr.bf16.gmra.mxu0 %v390
        %v2325 = vpop.f32.mrf.mxu0
        %v2326 = vadd.f32 %v1716, %v2325
        %v2327 = vpop.f32.mrf.mxu0
        %v2328 = vpop.f32.mrf.mxu0
        %v2329 = vadd.f32 %v1719, %v2328
        %v2330 = vpop.f32.mrf.mxu0
        %2331 = vmatprep.mubr.bf16.mxu0 %v393
        %2332 = vmatmul.mubr.bf16.gmra.mxu0 %v392
        %v2333 = vpop.f32.mrf.mxu0
        %v2334 = vadd.f32 %v1724, %v2333
        %v2335 = vpop.f32.mrf.mxu0
        %v2336 = vpop.f32.mrf.mxu0
        %v2337 = vadd.f32 %v1727, %v2336
        %v2338 = vpop.f32.mrf.mxu0
        %2339 = vmatprep.mubr.bf16.mxu0 %v395
        %2340 = vmatmul.mubr.bf16.gmra.mxu0 %v394
        %v2341 = vpop.f32.mrf.mxu0
        %v2342 = vadd.f32 %v1732, %v2341
        %v2343 = vpop.f32.mrf.mxu0
        %v2344 = vpop.f32.mrf.mxu0
        %v2345 = vadd.f32 %v1735, %v2344
        %v2346 = vpop.f32.mrf.mxu0
        %2347 = vmatprep.mubr.bf16.mxu0 %v397
        %2348 = vmatmul.mubr.bf16.gmra.mxu0 %v396
        %v2349 = vpop.f32.mrf.mxu0
        %v2350 = vadd.f32 %v1740, %v2349
        %v2351 = vpop.f32.mrf.mxu0
        %v2352 = vpop.f32.mrf.mxu0
        %v2353 = vadd.f32 %v1743, %v2352
        %v2354 = vpop.f32.mrf.mxu0
        %2355 = vmatprep.mubr.bf16.mxu0 %v399
        %2356 = vmatmul.mubr.bf16.gmra.mxu0 %v398
        %v2357 = vpop.f32.mrf.mxu0
        %v2358 = vadd.f32 %v1748, %v2357
        %v2359 = vpop.f32.mrf.mxu0
        %v2360 = vpop.f32.mrf.mxu0
        %v2361 = vadd.f32 %v1751, %v2360
        %v2362 = vpop.f32.mrf.mxu0
        %2363 = vmatprep.mubr.bf16.mxu0 %v401
        %2364 = vmatmul.mubr.bf16.gmra.mxu0 %v400
        %v2365 = vpop.f32.mrf.mxu0
        %v2366 = vadd.f32 %v1756, %v2365
        %v2367 = vpop.f32.mrf.mxu0
        %v2368 = vpop.f32.mrf.mxu0
        %v2369 = vadd.f32 %v1759, %v2368
        %v2370 = vpop.f32.mrf.mxu0
        %2371 = vmatprep.mubr.bf16.mxu0 %v403
        %2372 = vmatmul.mubr.bf16.gmra.mxu0 %v402
        %v2373 = vpop.f32.mrf.mxu0
        %v2374 = vadd.f32 %v1764, %v2373
        %v2375 = vpop.f32.mrf.mxu0
        %v2376 = vpop.f32.mrf.mxu0
        %v2377 = vadd.f32 %v1767, %v2376
        %v2378 = vpop.f32.mrf.mxu0
        %2379 = vmatprep.mubr.bf16.mxu0 %v405
        %2380 = vmatmul.mubr.bf16.gmra.mxu0 %v404
        %v2381 = vpop.f32.mrf.mxu0
        %v2382 = vadd.f32 %v1772, %v2381
        %v2383 = vpop.f32.mrf.mxu0
        %v2384 = vpop.f32.mrf.mxu0
        %v2385 = vadd.f32 %v1775, %v2384
        %v2386 = vpop.f32.mrf.mxu0
        %2387 = vmatprep.mubr.bf16.mxu0 %v407
        %2388 = vmatmul.mubr.bf16.gmra.mxu0 %v406
        %v2389 = vpop.f32.mrf.mxu0
        %v2390 = vadd.f32 %v1780, %v2389
        %v2391 = vpop.f32.mrf.mxu0
        %v2392 = vpop.f32.mrf.mxu0
        %v2393 = vadd.f32 %v1783, %v2392
        %v2394 = vpop.f32.mrf.mxu0
        %2395 = vmatprep.mubr.bf16.mxu0 %v409
        %2396 = vmatmul.mubr.bf16.gmra.mxu0 %v408
        %v2397 = vpop.f32.mrf.mxu0
        %v2398 = vadd.f32 %v1788, %v2397
        %v2399 = vpop.f32.mrf.mxu0
        %v2400 = vpop.f32.mrf.mxu0
        %v2401 = vadd.f32 %v1791, %v2400
        %v2402 = vpop.f32.mrf.mxu0
        %2403 = vmatprep.mubr.bf16.mxu0 %v411
        %2404 = vmatmul.mubr.bf16.gmra.mxu0 %v410
        %v2405 = vpop.f32.mrf.mxu0
        %v2406 = vadd.f32 %v1796, %v2405
        %v2407 = vpop.f32.mrf.mxu0
        %v2408 = vpop.f32.mrf.mxu0
        %v2409 = vadd.f32 %v1799, %v2408
        %v2410 = vpop.f32.mrf.mxu0
        %2411 = vmatprep.mubr.bf16.mxu0 %v413
        %2412 = vmatmul.mubr.bf16.gmra.mxu0 %v412
        %v2413 = vpop.f32.mrf.mxu0
        %v2414 = vadd.f32 %v1804, %v2413
        %v2415 = vpop.f32.mrf.mxu0
        %v2416 = vpop.f32.mrf.mxu0
        %v2417 = vadd.f32 %v1807, %v2416
        %v2418 = vpop.f32.mrf.mxu0
        %2419 = vdwg.mxu0
        %v2420 = vld [vmem:[%s4] sm:$0x7]
        %v2422 = vlaneseq
        %v2423 = vshrl.u32 %v2422, 7
        %v2424 = vsub.s32 0, %v2423
        %v2425 = vrot.slane %v2420, %v2424
        %v2426 = vlaneseq
        %v2427 = vshrl.u32 %v2426, 7
        %v2428 = vsub.s32 1, %v2427
        %v2429 = vrot.slane %v2420, %v2428
        %v2430 = vlaneseq
        %v2431 = vshrl.u32 %v2430, 7
        %v2432 = vsub.s32 2, %v2431
        %v2433 = vrot.slane %v2420, %v2432
        %v2437 = vadd.f32 %v2101, %v2425
        %v2438 = vadd.f32 %v2103, %v2429
        %v2439 = vadd.f32 %v2294, %v2433
        %v2440 = vadd.f32 %v2105, %v2425
        %v2441 = vadd.f32 %v2107, %v2429
        %v2442 = vadd.f32 %v2297, %v2433
        %v2443 = vadd.f32 %v2111, %v2425
        %v2444 = vadd.f32 %v2113, %v2429
        %v2445 = vadd.f32 %v2302, %v2433
        %v2446 = vadd.f32 %v2115, %v2425
        %v2447 = vadd.f32 %v2117, %v2429
        %v2448 = vadd.f32 %v2305, %v2433
        %v2449 = vadd.f32 %v2121, %v2425
        %v2450 = vadd.f32 %v2123, %v2429
        %v2451 = vadd.f32 %v2310, %v2433
        %v2452 = vadd.f32 %v2125, %v2425
        %v2453 = vadd.f32 %v2127, %v2429
        %v2454 = vadd.f32 %v2313, %v2433
        %v2455 = vadd.f32 %v2131, %v2425
        %v2456 = vadd.f32 %v2133, %v2429
        %v2457 = vadd.f32 %v2318, %v2433
        %v2458 = vadd.f32 %v2135, %v2425
        %v2459 = vadd.f32 %v2137, %v2429
        %v2460 = vadd.f32 %v2321, %v2433
        %v2461 = vadd.f32 %v2141, %v2425
        %v2462 = vadd.f32 %v2143, %v2429
        %v2463 = vadd.f32 %v2326, %v2433
        %v2464 = vadd.f32 %v2145, %v2425
        %v2465 = vadd.f32 %v2147, %v2429
        %v2466 = vadd.f32 %v2329, %v2433
        %v2467 = vadd.f32 %v2151, %v2425
        %v2468 = vadd.f32 %v2153, %v2429
        %v2469 = vadd.f32 %v2334, %v2433
        %v2470 = vadd.f32 %v2155, %v2425
        %v2471 = vadd.f32 %v2157, %v2429
        %v2472 = vadd.f32 %v2337, %v2433
        %v2473 = vadd.f32 %v2161, %v2425
        %v2474 = vadd.f32 %v2163, %v2429
        %v2475 = vadd.f32 %v2342, %v2433
        %v2476 = vadd.f32 %v2165, %v2425
        %v2477 = vadd.f32 %v2167, %v2429
        %v2478 = vadd.f32 %v2345, %v2433
        %v2479 = vadd.f32 %v2171, %v2425
        %v2480 = vadd.f32 %v2173, %v2429
        %v2481 = vadd.f32 %v2350, %v2433
        %v2482 = vadd.f32 %v2175, %v2425
        %v2483 = vadd.f32 %v2177, %v2429
        %v2484 = vadd.f32 %v2353, %v2433
        %v2485 = vadd.f32 %v2181, %v2425
        %v2486 = vadd.f32 %v2183, %v2429
        %v2487 = vadd.f32 %v2358, %v2433
        %v2488 = vadd.f32 %v2185, %v2425
        %v2489 = vadd.f32 %v2187, %v2429
        %v2490 = vadd.f32 %v2361, %v2433
        %v2491 = vadd.f32 %v2191, %v2425
        %v2492 = vadd.f32 %v2193, %v2429
        %v2493 = vadd.f32 %v2366, %v2433
        %v2494 = vadd.f32 %v2195, %v2425
        %v2495 = vadd.f32 %v2197, %v2429
        %v2496 = vadd.f32 %v2369, %v2433
        %v2497 = vadd.f32 %v2201, %v2425
        %v2498 = vadd.f32 %v2203, %v2429
        %v2499 = vadd.f32 %v2374, %v2433
        %v2500 = vadd.f32 %v2205, %v2425
        %v2501 = vadd.f32 %v2207, %v2429
        %v2502 = vadd.f32 %v2377, %v2433
        %v2503 = vadd.f32 %v2211, %v2425
        %v2504 = vadd.f32 %v2213, %v2429
        %v2505 = vadd.f32 %v2382, %v2433
        %v2506 = vadd.f32 %v2215, %v2425
        %v2507 = vadd.f32 %v2217, %v2429
        %v2508 = vadd.f32 %v2385, %v2433
        %v2509 = vadd.f32 %v2221, %v2425
        %v2510 = vadd.f32 %v2223, %v2429
        %v2511 = vadd.f32 %v2390, %v2433
        %v2512 = vadd.f32 %v2225, %v2425
        %v2513 = vadd.f32 %v2227, %v2429
        %v2514 = vadd.f32 %v2393, %v2433
        %v2515 = vadd.f32 %v2231, %v2425
        %v2516 = vadd.f32 %v2233, %v2429
        %v2517 = vadd.f32 %v2398, %v2433
        %v2518 = vadd.f32 %v2235, %v2425
        %v2519 = vadd.f32 %v2237, %v2429
        %v2520 = vadd.f32 %v2401, %v2433
        %v2521 = vadd.f32 %v2241, %v2425
        %v2522 = vadd.f32 %v2243, %v2429
        %v2523 = vadd.f32 %v2406, %v2433
        %v2524 = vadd.f32 %v2245, %v2425
        %v2525 = vadd.f32 %v2247, %v2429
        %v2526 = vadd.f32 %v2409, %v2433
        %v2527 = vadd.f32 %v2251, %v2425
        %v2528 = vadd.f32 %v2253, %v2429
        %v2529 = vadd.f32 %v2414, %v2433
        %v2530 = vadd.f32 %v2255, %v2425
        %v2531 = vadd.f32 %v2257, %v2429
        %v2532 = vadd.f32 %v2417, %v2433
        %2533 = vst [vmem:[%s313] sm:$0xff] %v2437
        %2534 = vst [vmem:[%s313 + $0x8] sm:$0xff] %v2438
        %2535 = vst [vmem:[%s313 + $0x10] sm:$0xff] %v2439
        %2536 = vst [vmem:[%s313 + $0x18] sm:$0xff] %v2440
        %2537 = vst [vmem:[%s313 + $0x20] sm:$0xff] %v2441
        %2538 = vst [vmem:[%s313 + $0x28] sm:$0xff] %v2442
        %2539 = vst [vmem:[%s313 + $0x30] sm:$0xff] %v2443
        %2540 = vst [vmem:[%s313 + $0x38] sm:$0xff] %v2444
        %2541 = vst [vmem:[%s313 + $0x40] sm:$0xff] %v2445
        %2542 = vst [vmem:[%s313 + $0x48] sm:$0xff] %v2446
        %2543 = vst [vmem:[%s313 + $0x50] sm:$0xff] %v2447
        %2544 = vst [vmem:[%s313 + $0x58] sm:$0xff] %v2448
        %2545 = vst [vmem:[%s313 + $0x60] sm:$0xff] %v2449
        %2546 = vst [vmem:[%s313 + $0x68] sm:$0xff] %v2450
        %2547 = vst [vmem:[%s313 + $0x70] sm:$0xff] %v2451
        %2548 = vst [vmem:[%s313 + $0x78] sm:$0xff] %v2452
        %2549 = vst [vmem:[%s313 + $0x80] sm:$0xff] %v2453
        %2550 = vst [vmem:[%s313 + $0x88] sm:$0xff] %v2454
        %2551 = vst [vmem:[%s313 + $0x90] sm:$0xff] %v2455
        %2552 = vst [vmem:[%s313 + $0x98] sm:$0xff] %v2456
        %2553 = vst [vmem:[%s313 + $0xa0] sm:$0xff] %v2457
        %2554 = vst [vmem:[%s313 + $0xa8] sm:$0xff] %v2458
        %2555 = vst [vmem:[%s313 + $0xb0] sm:$0xff] %v2459
        %2556 = vst [vmem:[%s313 + $0xb8] sm:$0xff] %v2460
        %2557 = vst [vmem:[%s313 + $0xc0] sm:$0xff] %v2461
        %2558 = vst [vmem:[%s313 + $0xc8] sm:$0xff] %v2462
        %2559 = vst [vmem:[%s313 + $0xd0] sm:$0xff] %v2463
        %2560 = vst [vmem:[%s313 + $0xd8] sm:$0xff] %v2464
        %2561 = vst [vmem:[%s313 + $0xe0] sm:$0xff] %v2465
        %2562 = vst [vmem:[%s313 + $0xe8] sm:$0xff] %v2466
        %2563 = vst [vmem:[%s313 + $0xf0] sm:$0xff] %v2467
        %2564 = vst [vmem:[%s313 + $0xf8] sm:$0xff] %v2468
        %2565 = vst [vmem:[%s313 + $0x100] sm:$0xff] %v2469
        %2566 = vst [vmem:[%s313 + $0x108] sm:$0xff] %v2470
        %2567 = vst [vmem:[%s313 + $0x110] sm:$0xff] %v2471
        %2568 = vst [vmem:[%s313 + $0x118] sm:$0xff] %v2472
        %2569 = vst [vmem:[%s313 + $0x120] sm:$0xff] %v2473
        %2570 = vst [vmem:[%s313 + $0x128] sm:$0xff] %v2474
        %2571 = vst [vmem:[%s313 + $0x130] sm:$0xff] %v2475
        %2572 = vst [vmem:[%s313 + $0x138] sm:$0xff] %v2476
        %2573 = vst [vmem:[%s313 + $0x140] sm:$0xff] %v2477
        %2574 = vst [vmem:[%s313 + $0x148] sm:$0xff] %v2478
        %2575 = vst [vmem:[%s313 + $0x150] sm:$0xff] %v2479
        %2576 = vst [vmem:[%s313 + $0x158] sm:$0xff] %v2480
        %2577 = vst [vmem:[%s313 + $0x160] sm:$0xff] %v2481
        %2578 = vst [vmem:[%s313 + $0x168] sm:$0xff] %v2482
        %2579 = vst [vmem:[%s313 + $0x170] sm:$0xff] %v2483
        %2580 = vst [vmem:[%s313 + $0x178] sm:$0xff] %v2484
        %2581 = vst [vmem:[%s313 + $0x180] sm:$0xff] %v2485
        %2582 = vst [vmem:[%s313 + $0x188] sm:$0xff] %v2486
        %2583 = vst [vmem:[%s313 + $0x190] sm:$0xff] %v2487
        %2584 = vst [vmem:[%s313 + $0x198] sm:$0xff] %v2488
        %2585 = vst [vmem:[%s313 + $0x1a0] sm:$0xff] %v2489
        %2586 = vst [vmem:[%s313 + $0x1a8] sm:$0xff] %v2490
        %2587 = vst [vmem:[%s313 + $0x1b0] sm:$0xff] %v2491
        %2588 = vst [vmem:[%s313 + $0x1b8] sm:$0xff] %v2492
        %2589 = vst [vmem:[%s313 + $0x1c0] sm:$0xff] %v2493
        %2590 = vst [vmem:[%s313 + $0x1c8] sm:$0xff] %v2494
        %2591 = vst [vmem:[%s313 + $0x1d0] sm:$0xff] %v2495
        %2592 = vst [vmem:[%s313 + $0x1d8] sm:$0xff] %v2496
        %2593 = vst [vmem:[%s313 + $0x1e0] sm:$0xff] %v2497
        %2594 = vst [vmem:[%s313 + $0x1e8] sm:$0xff] %v2498
        %2595 = vst [vmem:[%s313 + $0x1f0] sm:$0xff] %v2499
        %2596 = vst [vmem:[%s313 + $0x1f8] sm:$0xff] %v2500
        %2597 = vst [vmem:[%s313 + $0x200] sm:$0xff] %v2501
        %2598 = vst [vmem:[%s313 + $0x208] sm:$0xff] %v2502
        %2599 = vst [vmem:[%s313 + $0x210] sm:$0xff] %v2503
        %2600 = vst [vmem:[%s313 + $0x218] sm:$0xff] %v2504
        %2601 = vst [vmem:[%s313 + $0x220] sm:$0xff] %v2505
        %2602 = vst [vmem:[%s313 + $0x228] sm:$0xff] %v2506
        %2603 = vst [vmem:[%s313 + $0x230] sm:$0xff] %v2507
        %2604 = vst [vmem:[%s313 + $0x238] sm:$0xff] %v2508
        %2605 = vst [vmem:[%s313 + $0x240] sm:$0xff] %v2509
        %2606 = vst [vmem:[%s313 + $0x248] sm:$0xff] %v2510
        %2607 = vst [vmem:[%s313 + $0x250] sm:$0xff] %v2511
        %2608 = vst [vmem:[%s313 + $0x258] sm:$0xff] %v2512
        %2609 = vst [vmem:[%s313 + $0x260] sm:$0xff] %v2513
        %2610 = vst [vmem:[%s313 + $0x268] sm:$0xff] %v2514
        %2611 = vst [vmem:[%s313 + $0x270] sm:$0xff] %v2515
        %2612 = vst [vmem:[%s313 + $0x278] sm:$0xff] %v2516
        %2613 = vst [vmem:[%s313 + $0x280] sm:$0xff] %v2517
        %2614 = vst [vmem:[%s313 + $0x288] sm:$0xff] %v2518
        %2615 = vst [vmem:[%s313 + $0x290] sm:$0xff] %v2519
        %2616 = vst [vmem:[%s313 + $0x298] sm:$0xff] %v2520
        %2617 = vst [vmem:[%s313 + $0x2a0] sm:$0xff] %v2521
        %2618 = vst [vmem:[%s313 + $0x2a8] sm:$0xff] %v2522
        %2619 = vst [vmem:[%s313 + $0x2b0] sm:$0xff] %v2523
        %2620 = vst [vmem:[%s313 + $0x2b8] sm:$0xff] %v2524
        %2621 = vst [vmem:[%s313 + $0x2c0] sm:$0xff] %v2525
        %2622 = vst [vmem:[%s313 + $0x2c8] sm:$0xff] %v2526
        %2623 = vst [vmem:[%s313 + $0x2d0] sm:$0xff] %v2527
        %2624 = vst [vmem:[%s313 + $0x2d8] sm:$0xff] %v2528
        %2625 = vst [vmem:[%s313 + $0x2e0] sm:$0xff] %v2529
        %2626 = vst [vmem:[%s313 + $0x2e8] sm:$0xff] %v2530
        %2627 = vst [vmem:[%s313 + $0x2f0] sm:$0xff] %v2531
        %2628 = vst [vmem:[%s313 + $0x2f8] sm:$0xff] %v2532
        %s2629 = sand.u32 %s149, 1
        %s2630 = scalar_lea.sflag [#allocation4], %s2629
        %s2631 = sand.u32 %s149, 1
        %s2632 = smul.addr %s2631, 768
        %s2633 = scalar_lea.vmem [#allocation10], %s2632
        // Predicated region
        $region57: #{tpu_custom_call.1} parent=39 // pred_check
          %p2634 = pneg %p159
        $region58: #{tpu_custom_call.1} parent=39 // pred_check_branch
          %2636 = sbr.rel (%p2634) target = $region60
        $region59: #{tpu_custom_call.1} parent=39 // pred_region
          %s2637 = smul.u32 32, %s26
          %s2639 = ssub.s32 12288, 12288
          %2640 = vsyncadd %s2630, %s2639
          %s2641 = smul.addr %s2637, 3
          %s2642 = smul.addr %s2641, 128
          %s2643 = scalar_lea.hbm %s5, %s2642
          %s2644 = sshll.u32 %s2633, 4
          %s2645 = int_to_ptr.vmem [resolvable:$true] %s2644
          %2650 = dma.vmem_to_hbm [thread:$0]  %s2645, 12288, %s2643, %s2630, 384, 384, 24
        $region60: #{tpu_custom_call.1} parent=39 // pred_fallthru
          _
      $region40: #{tpu_custom_call.1} parent=5 // pred_fallthru
        _
      %p2651 = scmp.le.s32.totalorder 2, %s21
      // Predicated region
      $region61: #{tpu_custom_call.1} parent=5 // pred_check
        %p2652 = pneg %p2651
      $region62: #{tpu_custom_call.1} parent=5 // pred_check_branch
        %2654 = sbr.rel (%p2652) target = $region64
      $region63: #{tpu_custom_call.1} parent=5 // pred_region
        %s2655 = ssub.s32 %s21, 2
        // Predicated region
        $region65: #{tpu_custom_call.1} parent=63 // pred_check
          %p2656 = pneg %p165
        $region66: #{tpu_custom_call.1} parent=63 // pred_check_branch
          %2658 = sbr.rel (%p2656) target = $region68
        $region67: #{tpu_custom_call.1} parent=63 // pred_region
          %s2659 = sand.u32 %s150, 1
          %s2660 = scalar_lea.sflag [#allocation4], %s2659
          %s2661 = sand.u32 %s150, 1
          %s2662 = smul.addr %s2661, 768
          %s2663 = scalar_lea.vmem [#allocation10], %s2662
          %2664 = dma.done %s2660, 12288
        $region68: #{tpu_custom_call.1} parent=63 // pred_fallthru
          _
      $region64: #{tpu_custom_call.1} parent=5 // pred_fallthru
        _
    $region6: #{tpu_custom_call.1} parent=1 // loop_footer
      %s25 = sadd.s32 1, %s21
    $region7: #{tpu_custom_call.1} parent=1 // loop_footer_branch
      %20 = sbr.rel target = $region3
    $region8: #{tpu_custom_call.1} parent=1 // loop_exit
      _
    %2665 = vsyncpa [#allocation3], 1
    %s2666 = scalar_lea.sflag [#allocation3], 1
    %2667 = vsyncpa %s2666, 1
    %2668 = vsyncpa [#allocation6], 1
    %s2669 = scalar_lea.sflag [#allocation6], 1
    %2670 = vsyncpa %s2669, 1
    %2671 = vsyncpa [#allocation9], 1
    %2672 = vsyncpa [#allocation4], 1
    %s2673 = scalar_lea.sflag [#allocation4], 1
    %2674 = vsyncpa %s2673, 1

</llo_original>
